<compile_context>
chip_gen: v7x
topology: tpu7x:2x2x1
jax: 0.10.0
libtpu: 0.0.40
codegen_flags: <defaults>
</compile_context>

<pallas_src>
import functools
import math

import jax
import jax.numpy as jnp
import numpy as np
from jax.experimental import pallas as pl
from jax.experimental.pallas import tpu as pltpu

KERNEL_SIZE = 5
PAD = KERNEL_SIZE // 2
N_TAPS = 2 * KERNEL_SIZE          # 2 input channels x 5 taps
BN_EPS = 1e-5


def _round_up(x, m):
    return (x + m - 1) // m * m


def _pick_channel_group(c, d, target_k=512):
    """Channels per fc-weight streaming block; cg*D ~ 512 contraction depth.

    Returns 1 unless D is a multiple of 128 so that every per-channel write
    into the (TB, cg*D) staging scratch lands on a 128-lane boundary."""
    if d % 128 != 0:
        return 1
    cg = max(1, min(c, max(1, target_k // max(d, 1))))
    while c % cg:
        cg -= 1
    return cg


def _pick_block_n(n, target=512):
    return min(target, _round_up(max(n, 1), 128))


def _vmem_cap_bytes():
    """Physical VMEM per TensorCore (generation-aware); conservative fallback."""
    try:
        cap = getattr(pltpu.get_tpu_info(), "vmem_capacity_bytes", None)
        if cap:
            return int(cap)
    except Exception:
        pass
    return 64 << 20          # v7x-sized fallback: safe on every generation


def _vmem_limit(est_bytes):
    cap = _vmem_cap_bytes()
    return int(max(min(int(est_bytes * 1.25) + (2 << 20), cap - (8 << 20)),
                   16 << 20))


# --------------------------------------------------------------------------
# Kernel 1: query representation h = PReLU(fc(relu(bn1(conv(bn0(x))))) + b)
# --------------------------------------------------------------------------
def h_kernel(slab_ref, convw_ref, bn1b_ref, fcw_ref, fcb_ref, alpha_ref,
             h_ref, acc_ref, z_ref):
    """grid = (batch tiles, channel groups); channel-group axis innermost.

    slab_ref : (10, TB, D)   VMEM f32   bn0-normalized shifted conv slabs
    convw_ref: (C*10,)       SMEM f32   conv weights with BN1 scale folded in
    bn1b_ref : (C,)          SMEM f32   BN1 shift (conv bias folded in)
    fcw_ref  : (cg*D, D)     VMEM       streamed fc.weight.T block for group g
    fcb_ref  : (1, D)        VMEM f32   fc bias
    alpha_ref: (1, D)        VMEM f32   PReLU slope
    h_ref    : (TB, D)       VMEM       output: query representation
    acc_ref  : (TB, D)       VMEM f32   scratch accumulator (persists over g)
    z_ref    : (TB, cg*D)    VMEM       scratch: ReLU'd conv maps of this group
    """
    g = pl.program_id(1)
    d = acc_ref.shape[1]
    cg = fcw_ref.shape[0] // d

    @pl.when(g == 0)
    def _init():
        acc_ref[...] = jnp.zeros_like(acc_ref)

    # Hoist the 10 tap planes once (clean 2-D loads, no per-channel reslicing).
    taps = [slab_ref[k] for k in range(N_TAPS)]            # each (TB, D) f32

    # Conv1d + folded BN1 + ReLU for the cg channels of this group, written at
    # lane offset j*D (128-aligned by construction, or the full buffer if cg=1).
    for j in range(cg):                                    # static unrolled loop
        base = (g * cg + j) * N_TAPS
        z = taps[0] * convw_ref[base]
        for k in range(1, N_TAPS):
            z = z + taps[k] * convw_ref[base + k]
        z = z + bn1b_ref[g * cg + j]                       # BN1 shift (+conv bias)
        z_ref[:, j * d:(j + 1) * d] = jnp.maximum(z, 0.0).astype(z_ref.dtype)

    # Partial fc matmul: (TB, cg*D) x (cg*D, D) on the MXU, f32 accumulation.
    acc_ref[...] += jnp.dot(z_ref[...], fcw_ref[...],
                            preferred_element_type=jnp.float32)

    @pl.when(g == pl.num_programs(1) - 1)
    def _finalize():
        h = acc_ref[...] + fcb_ref[...]                    # fc bias
        h = jnp.where(h > 0.0, h, alpha_ref[...] * h)      # PReLU ('Bert' branch)
        h_ref[...] = h.astype(h_ref.dtype)


# --------------------------------------------------------------------------
# Kernel 2: scores = h @ ent_emb.T + b
# --------------------------------------------------------------------------
def scores_kernel(h_ref, ent_ref, entb_ref, out_ref):
    """grid = (batch tiles, entity tiles), both axes parallel.

    h_ref   : (TB, D)   VMEM   query representation tile
    ent_ref : (TN, D)   VMEM   entity embedding tile (no transpose anywhere)
    entb_ref: (1, TN)   VMEM   per-entity score bias tile
    out_ref : (TB, TN)  VMEM   scores tile (lane-dense)
    """
    scores = jax.lax.dot_general(
        h_ref[...], ent_ref[...],
        dimension_numbers=(((1,), (1,)), ((), ())),        # contract last dims
        preferred_element_type=jnp.float32)
    out_ref[...] = (scores + entb_ref[...]).astype(out_ref.dtype)


# --------------------------------------------------------------------------
# Parameter folding / packing (one-time, hoisted out of the per-call forward)
# --------------------------------------------------------------------------
def prepare_params(params, *, compute_dtype=jnp.bfloat16, block_n=128):
    ent = params["ent_emb"]
    N, D = ent.shape
    C = params["conv_w"].shape[0]

    bn0_s = params["bn0_gamma"] / jnp.sqrt(params["bn0_var"] + BN_EPS)
    bn0_b = params["bn0_beta"] - params["bn0_mean"] * bn0_s
    bn1_s = params["bn1_gamma"] / jnp.sqrt(params["bn1_var"] + BN_EPS)
    # bn1(conv + b) = conv * (w*s)  +  ((b - mean)*s + beta)
    bn1_b = (params["conv_b"] - params["bn1_mean"]) * bn1_s + params["bn1_beta"]
    conv_w_folded = params["conv_w"] * bn1_s[:, None, None]   # BN1 scale folded

    # fc.weight.T laid out channel-major (C*D, D): the h-kernel streams
    # contiguous (cg*D, D) blocks from HBM per channel group.
    fcw = params["fc_w"].T.reshape(C * D, D).astype(compute_dtype)

    n_pad = _round_up(N, block_n)
    ent_nd = jnp.pad(ent, ((0, n_pad - N), (0, 0))).astype(compute_dtype)
    score_b = jnp.pad(params["score_b"], (0, n_pad - N)).reshape(1, n_pad)

    return {
        "ent_emb": ent,                                    # f32, for the e1 gather
        "rel_emb": params["rel_emb"],
        "bn0_s": bn0_s,
        "bn0_b": bn0_b,
        "conv_w_flat": conv_w_folded.reshape(C * N_TAPS).astype(jnp.float32),
        "bn1_b": bn1_b.astype(jnp.float32),
        "fcw": fcw,
        "fc_b": params["fc_b"].reshape(1, D).astype(jnp.float32),
        "alpha": params["prelu_alpha"].reshape(1, D).astype(jnp.float32),
        "ent_nd": ent_nd,
        "score_b": score_b.astype(jnp.float32),
    }


# --------------------------------------------------------------------------
# Forward
# --------------------------------------------------------------------------
def convtranse_forward(queries, prep, *, block_b_max=256, block_n=128):
    ent_emb = prep["ent_emb"]
    N, D = ent_emb.shape
    n_pad = prep["ent_nd"].shape[0]
    assert n_pad % block_n == 0
    C = prep["conv_w_flat"].shape[0] // N_TAPS
    compute_dtype = prep["fcw"].dtype
    cbytes = jnp.dtype(compute_dtype).itemsize
    B = queries.shape[0]

    # ---- embedding gather + BN0 + shifted conv slabs (cheap XLA prologue) ----
    e1_e = jnp.take(ent_emb, queries[:, 0], axis=0)                 # (B, D)
    rel_e = jnp.take(prep["rel_emb"], queries[:, 1], axis=0)        # (B, D)
    x = jnp.stack([e1_e, rel_e], axis=1)                            # (B, 2, D)
    x = x * prep["bn0_s"][None, :, None] + prep["bn0_b"][None, :, None]
    # inp_drop / feature_map_drop / hidden_drop: identity in eval mode.
    xp = jnp.pad(x, ((0, 0), (0, 0), (PAD, PAD)))                   # (B, 2, D+4)
    # TODO(synk): the 10 shifted slabs could instead be generated in-kernel with
    # pltpu.roll on a (2, TB, D) block to cut slab HBM/VMEM traffic ~5x.
    slabs = jnp.stack(
        [xp[:, i, k:k + D] for i in range(2) for k in range(KERNEL_SIZE)],
        axis=0)                                                     # (10, B, D)

    # Batch tile: no fixed-128 padding — multiples of 16 keep bf16 sublane tiling.
    block_b = min(block_b_max, _round_up(max(B, 1), 16))
    b_pad = _round_up(max(B, 1), block_b)
    slabs = jnp.pad(slabs, ((0, 0), (0, b_pad - B), (0, 0)))

    cg = _pick_channel_group(C, D)
    gk = cg * D
    n_groups = C // cg

    smem = pl.BlockSpec(memory_space=pltpu.MemorySpace.SMEM)

    # ---------------- kernel 1: query representation h ----------------
    vmem_h = (2 * N_TAPS * block_b * D * 4      # slab tile (double-buffered)
              + 2 * gk * D * cbytes             # streamed fc-weight block
              + 2 * block_b * D * cbytes        # h output tile
              + block_b * D * 4                 # f32 accumulator scratch
              + block_b * gk * cbytes           # z staging scratch
              + 4 * D * 4 * 2)                  # fc bias + alpha
    h = pl.pallas_call(
        h_kernel,
        out_shape=jax.ShapeDtypeStruct((b_pad, D), compute_dtype),
        grid=(b_pad // block_b, n_groups),
        in_specs=[
            pl.BlockSpec((N_TAPS, block_b, D), lambda b, g: (0, b, 0)),  # slabs
            smem,                                                        # conv w
            smem,                                                        # bn1 shift
            pl.BlockSpec((gk, D), lambda b, g: (g, 0)),                  # fc weights
            pl.BlockSpec((1, D), lambda b, g: (0, 0)),                   # fc bias
            pl.BlockSpec((1, D), lambda b, g: (0, 0)),                   # prelu alpha
        ],
        out_specs=pl.BlockSpec((block_b, D), lambda b, g: (b, 0)),
        scratch_shapes=[pltpu.VMEM((block_b, D), jnp.float32),
                        pltpu.VMEM((block_b, gk), compute_dtype)],
        compiler_params=pltpu.CompilerParams(
            dimension_semantics=("parallel", "arbitrary"),
            vmem_limit_bytes=_vmem_limit(vmem_h)),
        cost_estimate=pl.CostEstimate(
            flops=2 * b_pad * C * D * (N_TAPS + D),
            transcendentals=0,
            bytes_accessed=(N_TAPS * b_pad * D * 4
                            + (b_pad // block_b) * C * D * D * cbytes
                            + b_pad * D * cbytes)),
    )(slabs, prep["conv_w_flat"], prep["bn1_b"], prep["fcw"],
      prep["fc_b"], prep["alpha"])

    # ---------------- kernel 2: scores = h @ ent^T + b ----------------
    # TODO(synk): emit bf16 scores if the downstream consumer (ranking / top-k)
    # tolerates it — halves the output writeback HBM traffic.
    vmem_s = (2 * block_b * D * cbytes          # h tile
              + 2 * block_n * D * cbytes        # entity tile
              + 2 * block_n * 4                 # bias tile
              + 2 * block_b * block_n * 4)      # output tile
    scores = pl.pallas_call(
        scores_kernel,
        out_shape=jax.ShapeDtypeStruct((b_pad, n_pad), jnp.float32),
        grid=(b_pad // block_b, n_pad // block_n),
        in_specs=[
            pl.BlockSpec((block_b, D), lambda b, n: (b, 0)),             # h
            pl.BlockSpec((block_n, D), lambda b, n: (n, 0)),             # entities
            pl.BlockSpec((1, block_n), lambda b, n: (0, n)),             # score bias
        ],
        out_specs=pl.BlockSpec((block_b, block_n), lambda b, n: (b, n)),
        compiler_params=pltpu.CompilerParams(
            dimension_semantics=("parallel", "parallel"),
            vmem_limit_bytes=_vmem_limit(vmem_s)),
        cost_estimate=pl.CostEstimate(
            flops=2 * b_pad * n_pad * D,
            transcendentals=0,
            bytes_accessed=(b_pad * D * cbytes
                            + (b_pad // block_b) * n_pad * D * cbytes
                            + b_pad * n_pad * 4 + n_pad * 4)),
    )(h, prep["ent_nd"], prep["score_b"])

    return scores[:B, :N]


# --------------------------------------------------------------------------
# Pure-JAX reference (mirrors the PyTorch eval-mode forward, f32)
# --------------------------------------------------------------------------
def reference_forward(queries, params):
    ent_emb = params["ent_emb"]
    N, D = ent_emb.shape
    C = params["conv_w"].shape[0]
    B = queries.shape[0]

    e1_e = jnp.take(ent_emb, queries[:, 0], axis=0)
    rel_e = jnp.take(params["rel_emb"], queries[:, 1], axis=0)
    x = jnp.stack([e1_e, rel_e], axis=1)
    s0 = params["bn0_gamma"] / jnp.sqrt(params["bn0_var"] + BN_EPS)
    b0 = params["bn0_beta"] - params["bn0_mean"] * s0
    x = x * s0[None, :, None] + b0[None, :, None]
    xp = jnp.pad(x, ((0, 0), (0, 0), (PAD, PAD)))

    conv = jnp.zeros((B, C, D), jnp.float32)
    for i in range(2):
        for k in range(KERNEL_SIZE):
            conv = conv + xp[:, i, k:k + D][:, None, :] * \
                params["conv_w"][:, i, k][None, :, None]
    conv = conv + params["conv_b"][None, :, None]
    s1 = params["bn1_gamma"] / jnp.sqrt(params["bn1_var"] + BN_EPS)
    b1 = params["bn1_beta"] - params["bn1_mean"] * s1
    conv = conv * s1[None, :, None] + b1[None, :, None]
    conv = jnp.maximum(conv, 0.0)

    flat = conv.reshape(B, C * D)                          # same as .view(B, -1)
    h = jnp.matmul(flat, params["fc_w"].T,
                   precision=jax.lax.Precision.HIGHEST) + params["fc_b"]
    h = jnp.where(h > 0, h, params["prelu_alpha"][None, :] * h)
    scores = jnp.matmul(h, ent_emb.T, precision=jax.lax.Precision.HIGHEST)
    return scores + params["score_b"][None, :]


def make_params(key, *, num_entities, num_relations, embedding_dim, channels):
    N, R, D, C = num_entities, num_relations, embedding_dim, channels
    ks = jax.random.split(key, 6)
    xav_rel = math.sqrt(2.0 / (R + D))
    return {
        # synthetic stand-in for the pretrained BERT entity embedding matrix
        "ent_emb": 0.02 * jax.random.normal(ks[0], (N, D), jnp.float32),
        "rel_emb": xav_rel * jax.random.normal(ks[1], (R, D), jnp.float32),
        "conv_w": 0.1 * jax.random.normal(ks[2], (C, 2, KERNEL_SIZE), jnp.float32),
        "conv_b": 0.01 * jax.random.normal(ks[3], (C,), jnp.float32),
        "fc_w": (1.0 / math.sqrt(C * D)) *
                jax.random.normal(ks[4], (D, C * D), jnp.float32),
        "fc_b": 0.01 * jax.random.normal(ks[5], (D,), jnp.float32),
        # torch.nn.PReLU(embedding_dim) default init 0.25
        "prelu_alpha": 0.25 * jnp.ones((D,), jnp.float32),
        "score_b": jnp.zeros((N,), jnp.float32),           # register_parameter('b')
        # fresh BatchNorm running stats / affine params (eval mode)
        "bn0_gamma": jnp.ones((2,), jnp.float32),
        "bn0_beta": jnp.zeros((2,), jnp.float32),
        "bn0_mean": jnp.zeros((2,), jnp.float32),
        "bn0_var": jnp.ones((2,), jnp.float32),
        "bn1_gamma": jnp.ones((C,), jnp.float32),
        "bn1_beta": jnp.zeros((C,), jnp.float32),
        "bn1_mean": jnp.zeros((C,), jnp.float32),
        "bn1_var": jnp.ones((C,), jnp.float32),
    }


if __name__ == "__main__":
    B, N, R, D, C = 8, 64, 16, 128, 8
    BLOCK_N = _pick_block_n(N)                 # 128 here; up to 512 for large N

    key = jax.random.PRNGKey(0)
    k_params, k_e1, k_rel = jax.random.split(key, 3)
    params = make_params(k_params, num_entities=N, num_relations=R,
                         embedding_dim=D, channels=C)
    e1 = jax.random.randint(k_e1, (B,), 0, N, dtype=jnp.int32)
    rel = jax.random.randint(k_rel, (B,), 0, R, dtype=jnp.int32)
    queries = jnp.stack([e1, rel], axis=1)                 # (B, 2)

    ref = reference_forward(queries, params)

    fwd = jax.jit(functools.partial(convtranse_forward,
                                    block_b_max=256, block_n=BLOCK_N))

    # 1) exact-math check: f32 MXU operands, tight tolerance.
    prep_f32 = prepare_params(params, compute_dtype=jnp.float32, block_n=BLOCK_N)
    out_f32 = fwd(queries, prep_f32)
    jax.block_until_ready(out_f32)
    np.testing.assert_allclose(np.asarray(out_f32), np.asarray(ref),
                               rtol=1e-3, atol=1e-4)

    # 2) fast path: bf16 MXU operands with f32 accumulation.
    prep_bf16 = prepare_params(params, compute_dtype=jnp.bfloat16, block_n=BLOCK_N)
    out_bf16 = fwd(queries, prep_bf16)
    jax.block_until_ready(out_bf16)
    np.testing.assert_allclose(np.asarray(out_bf16), np.asarray(ref),
                               rtol=5e-2, atol=2e-3)

    assert out_f32.shape == (B, N) and out_bf16.shape == (B, N)
    print("KERNEL_OK")
</pallas_src>

<mosaic_0001>
module attributes {stable_mosaic.version = 11 : i64} {
  func.func @scores_kernel(%arg0: i32, %arg1: i32, %arg2: memref<16x128xf32, #tpu.memory_space<vmem>>, %arg3: memref<128x128xf32, #tpu.memory_space<vmem>>, %arg4: memref<1x128xf32, #tpu.memory_space<vmem>>, %arg5: memref<16x128xf32, #tpu.memory_space<vmem>>) attributes {dimension_semantics = [#tpu.dimension_semantics<parallel>, #tpu.dimension_semantics<parallel>], iteration_bounds = array<i64: 1, 1>, scalar_prefetch = 0 : i64, scratch_operands = 0 : i64, tpu.core_type = #tpu.core_type<tc>, window_params = [{transform_indices = @transform_0, window_bounds = array<i64: 16, 128>}, {transform_indices = @transform_1, window_bounds = array<i64: 128, 128>}, {transform_indices = @transform_2, window_bounds = array<i64: 1, 128>}, {transform_indices = @transform_3, window_bounds = array<i64: 16, 128>}]} {
    %c0 = arith.constant 0 : index
    %c0_0 = arith.constant 0 : index
    %0 = vector.load %arg2[%c0, %c0_0] : memref<16x128xf32, #tpu.memory_space<vmem>>, vector<16x128xf32>
    %c0_1 = arith.constant 0 : index
    %c0_2 = arith.constant 0 : index
    %1 = vector.load %arg3[%c0_1, %c0_2] : memref<128x128xf32, #tpu.memory_space<vmem>>, vector<128x128xf32>
    %cst = arith.constant dense<0.000000e+00> : vector<16x128xf32>
    %2 = tpu.matmul %0, %1, %cst {dimension_numbers = #tpu.dot_dimension_numbers<[1], [1], [0], [0], [0, 0, 1, 0], [], []>} : vector<16x128xf32>, vector<128x128xf32>, vector<16x128xf32> -> vector<16x128xf32>
    %c0_3 = arith.constant 0 : index
    %c0_4 = arith.constant 0 : index
    %3 = vector.load %arg4[%c0_3, %c0_4] : memref<1x128xf32, #tpu.memory_space<vmem>>, vector<1x128xf32>
    %4 = vector.broadcast %3 : vector<1x128xf32> to vector<16x128xf32>
    %5 = arith.addf %2, %4 : vector<16x128xf32>
    %c0_5 = arith.constant 0 : index
    %c0_6 = arith.constant 0 : index
    %6 = vector.load %arg5[%c0_5, %c0_6] : memref<16x128xf32, #tpu.memory_space<vmem>>, vector<16x128xf32>
    tpu.vector_store %arg5[%c0_5, %c0_6], %5 {strides = array<i32>} : memref<16x128xf32, #tpu.memory_space<vmem>>, vector<16x128xf32>,
    return
  }
  func.func @transform_0(%arg0: i32, %arg1: i32) -> (i32, i32) {
    %c0_i32 = arith.constant 0 : i32
    %c0_i32_0 = arith.constant 0 : i32
    return %arg0, %c0_i32 : i32, i32
  }
  func.func @transform_1(%arg0: i32, %arg1: i32) -> (i32, i32) {
    %c0_i32 = arith.constant 0 : i32
    %c0_i32_0 = arith.constant 0 : i32
    return %arg1, %c0_i32 : i32, i32
  }
  func.func @transform_2(%arg0: i32, %arg1: i32) -> (i32, i32) {
    %c0_i32 = arith.constant 0 : i32
    %c0_i32_0 = arith.constant 0 : i32
    return %c0_i32, %arg1 : i32, i32
  }
  func.func @transform_3(%arg0: i32, %arg1: i32) -> (i32, i32) {
    %c0_i32 = arith.constant 0 : i32
    return %arg0, %arg1 : i32, i32
  }
}

module attributes {stable_mosaic.version = 11 : i64} {
  func.func @h_kernel(%arg0: i32, %arg1: i32, %arg2: memref<10x16x128xf32, #tpu.memory_space<vmem>>, %arg3: memref<80xf32, #tpu.memory_space<smem>>, %arg4: memref<8xf32, #tpu.memory_space<smem>>, %arg5: memref<512x128xf32, #tpu.memory_space<vmem>>, %arg6: memref<1x128xf32, #tpu.memory_space<vmem>>, %arg7: memref<1x128xf32, #tpu.memory_space<vmem>>, %arg8: memref<16x128xf32, #tpu.memory_space<vmem>>, %arg9: memref<16x128xf32, #tpu.memory_space<vmem>>, %arg10: memref<16x512xf32, #tpu.memory_space<vmem>>) attributes {dimension_semantics = [#tpu.dimension_semantics<parallel>, #tpu.dimension_semantics<arbitrary>], iteration_bounds = array<i64: 1, 2>, scalar_prefetch = 0 : i64, scratch_operands = 2 : i64, tpu.core_type = #tpu.core_type<tc>, window_params = [{transform_indices = @transform_0, window_bounds = array<i64: 10, 16, 128>}, {transform_indices = @transform_1, window_bounds = array<i64: 80>}, {transform_indices = @transform_2, window_bounds = array<i64: 8>}, {transform_indices = @transform_3, window_bounds = array<i64: 512, 128>}, {pipeline_mode = #tpu.pipeline_mode<synchronous>, transform_indices = @transform_4, window_bounds = array<i64: 1, 128>}, {pipeline_mode = #tpu.pipeline_mode<synchronous>, transform_indices = @transform_5, window_bounds = array<i64: 1, 128>}, {transform_indices = @transform_6, window_bounds = array<i64: 16, 128>}]} {
    %c0_i32 = arith.constant 0 : i32
    %0 = arith.cmpi eq, %arg1, %c0_i32 : i32
    %1 = arith.extui %0 : i1 to i32
    %c0_i32_0 = arith.constant 0 : i32
    %2 = arith.cmpi ne, %1, %c0_i32_0 : i32
    scf.if %2 {
      %cst_86 = arith.constant 0.000000e+00 : f32
      %312 = vector.broadcast %cst_86 : f32 to vector<16x128xf32>
      %c0_87 = arith.constant 0 : index
      %c0_88 = arith.constant 0 : index
      %313 = vector.load %arg9[%c0_87, %c0_88] : memref<16x128xf32, #tpu.memory_space<vmem>>, vector<16x128xf32>
      tpu.vector_store %arg9[%c0_87, %c0_88], %312 {strides = array<i32>} : memref<16x128xf32, #tpu.memory_space<vmem>>, vector<16x128xf32>,
    } else {
    }
    %c0 = arith.constant 0 : index
    %c0_1 = arith.constant 0 : index
    %c0_2 = arith.constant 0 : index
    %3 = vector.load %arg2[%c0, %c0_1, %c0_2] : memref<10x16x128xf32, #tpu.memory_space<vmem>>, vector<1x16x128xf32>
    %4 = vector.shape_cast %3 : vector<1x16x128xf32> to vector<16x128xf32>
    %c1 = arith.constant 1 : index
    %c0_3 = arith.constant 0 : index
    %c0_4 = arith.constant 0 : index
    %5 = vector.load %arg2[%c1, %c0_3, %c0_4] : memref<10x16x128xf32, #tpu.memory_space<vmem>>, vector<1x16x128xf32>
    %6 = vector.shape_cast %5 : vector<1x16x128xf32> to vector<16x128xf32>
    %c2 = arith.constant 2 : index
    %c0_5 = arith.constant 0 : index
    %c0_6 = arith.constant 0 : index
    %7 = vector.load %arg2[%c2, %c0_5, %c0_6] : memref<10x16x128xf32, #tpu.memory_space<vmem>>, vector<1x16x128xf32>
    %8 = vector.shape_cast %7 : vector<1x16x128xf32> to vector<16x128xf32>
    %c3 = arith.constant 3 : index
    %c0_7 = arith.constant 0 : index
    %c0_8 = arith.constant 0 : index
    %9 = vector.load %arg2[%c3, %c0_7, %c0_8] : memref<10x16x128xf32, #tpu.memory_space<vmem>>, vector<1x16x128xf32>
    %10 = vector.shape_cast %9 : vector<1x16x128xf32> to vector<16x128xf32>
    %c4 = arith.constant 4 : index
    %c0_9 = arith.constant 0 : index
    %c0_10 = arith.constant 0 : index
    %11 = vector.load %arg2[%c4, %c0_9, %c0_10] : memref<10x16x128xf32, #tpu.memory_space<vmem>>, vector<1x16x128xf32>
    %12 = vector.shape_cast %11 : vector<1x16x128xf32> to vector<16x128xf32>
    %c5 = arith.constant 5 : index
    %c0_11 = arith.constant 0 : index
    %c0_12 = arith.constant 0 : index
    %13 = vector.load %arg2[%c5, %c0_11, %c0_12] : memref<10x16x128xf32, #tpu.memory_space<vmem>>, vector<1x16x128xf32>
    %14 = vector.shape_cast %13 : vector<1x16x128xf32> to vector<16x128xf32>
    %c6 = arith.constant 6 : index
    %c0_13 = arith.constant 0 : index
    %c0_14 = arith.constant 0 : index
    %15 = vector.load %arg2[%c6, %c0_13, %c0_14] : memref<10x16x128xf32, #tpu.memory_space<vmem>>, vector<1x16x128xf32>
    %16 = vector.shape_cast %15 : vector<1x16x128xf32> to vector<16x128xf32>
    %c7 = arith.constant 7 : index
    %c0_15 = arith.constant 0 : index
    %c0_16 = arith.constant 0 : index
    %17 = vector.load %arg2[%c7, %c0_15, %c0_16] : memref<10x16x128xf32, #tpu.memory_space<vmem>>, vector<1x16x128xf32>
    %18 = vector.shape_cast %17 : vector<1x16x128xf32> to vector<16x128xf32>
    %c8 = arith.constant 8 : index
    %c0_17 = arith.constant 0 : index
    %c0_18 = arith.constant 0 : index
    %19 = vector.load %arg2[%c8, %c0_17, %c0_18] : memref<10x16x128xf32, #tpu.memory_space<vmem>>, vector<1x16x128xf32>
    %20 = vector.shape_cast %19 : vector<1x16x128xf32> to vector<16x128xf32>
    %c9 = arith.constant 9 : index
    %c0_19 = arith.constant 0 : index
    %c0_20 = arith.constant 0 : index
    %21 = vector.load %arg2[%c9, %c0_19, %c0_20] : memref<10x16x128xf32, #tpu.memory_space<vmem>>, vector<1x16x128xf32>
    %22 = vector.shape_cast %21 : vector<1x16x128xf32> to vector<16x128xf32>
    %c4_i32 = arith.constant 4 : i32
    %23 = arith.muli %arg1, %c4_i32 : i32
    %c0_i32_21 = arith.constant 0 : i32
    %24 = arith.addi %23, %c0_i32_21 : i32
    %c10_i32 = arith.constant 10 : i32
    %25 = arith.muli %24, %c10_i32 : i32
    %26 = arith.index_cast %25 : i32 to index
    %27 = memref.load %arg3[%26] : memref<80xf32, #tpu.memory_space<smem>>
    %28 = vector.broadcast %27 : f32 to vector<16x128xf32>
    %29 = arith.mulf %4, %28 : vector<16x128xf32>
    %c1_i32 = arith.constant 1 : i32
    %30 = arith.addi %25, %c1_i32 : i32
    %31 = arith.index_cast %30 : i32 to index
    %32 = memref.load %arg3[%31] : memref<80xf32, #tpu.memory_space<smem>>
    %33 = vector.broadcast %32 : f32 to vector<16x128xf32>
    %34 = arith.mulf %6, %33 : vector<16x128xf32>
    %35 = arith.addf %29, %34 : vector<16x128xf32>
    %c2_i32 = arith.constant 2 : i32
    %36 = arith.addi %25, %c2_i32 : i32
    %37 = arith.index_cast %36 : i32 to index
    %38 = memref.load %arg3[%37] : memref<80xf32, #tpu.memory_space<smem>>
    %39 = vector.broadcast %38 : f32 to vector<16x128xf32>
    %40 = arith.mulf %8, %39 : vector<16x128xf32>
    %41 = arith.addf %35, %40 : vector<16x128xf32>
    %c3_i32 = arith.constant 3 : i32
    %42 = arith.addi %25, %c3_i32 : i32
    %43 = arith.index_cast %42 : i32 to index
    %44 = memref.load %arg3[%43] : memref<80xf32, #tpu.memory_space<smem>>
    %45 = vector.broadcast %44 : f32 to vector<16x128xf32>
    %46 = arith.mulf %10, %45 : vector<16x128xf32>
    %47 = arith.addf %41, %46 : vector<16x128xf32>
    %c4_i32_22 = arith.constant 4 : i32
    %48 = arith.addi %25, %c4_i32_22 : i32
    %49 = arith.index_cast %48 : i32 to index
    %50 = memref.load %arg3[%49] : memref<80xf32, #tpu.memory_space<smem>>
    %51 = vector.broadcast %50 : f32 to vector<16x128xf32>
    %52 = arith.mulf %12, %51 : vector<16x128xf32>
    %53 = arith.addf %47, %52 : vector<16x128xf32>
    %c5_i32 = arith.constant 5 : i32
    %54 = arith.addi %25, %c5_i32 : i32
    %55 = arith.index_cast %54 : i32 to index
    %56 = memref.load %arg3[%55] : memref<80xf32, #tpu.memory_space<smem>>
    %57 = vector.broadcast %56 : f32 to vector<16x128xf32>
    %58 = arith.mulf %14, %57 : vector<16x128xf32>
    %59 = arith.addf %53, %58 : vector<16x128xf32>
    %c6_i32 = arith.constant 6 : i32
    %60 = arith.addi %25, %c6_i32 : i32
    %61 = arith.index_cast %60 : i32 to index
    %62 = memref.load %arg3[%61] : memref<80xf32, #tpu.memory_space<smem>>
    %63 = vector.broadcast %62 : f32 to vector<16x128xf32>
    %64 = arith.mulf %16, %63 : vector<16x128xf32>
    %65 = arith.addf %59, %64 : vector<16x128xf32>
    %c7_i32 = arith.constant 7 : i32
    %66 = arith.addi %25, %c7_i32 : i32
    %67 = arith.index_cast %66 : i32 to index
    %68 = memref.load %arg3[%67] : memref<80xf32, #tpu.memory_space<smem>>
    %69 = vector.broadcast %68 : f32 to vector<16x128xf32>
    %70 = arith.mulf %18, %69 : vector<16x128xf32>
    %71 = arith.addf %65, %70 : vector<16x128xf32>
    %c8_i32 = arith.constant 8 : i32
    %72 = arith.addi %25, %c8_i32 : i32
    %73 = arith.index_cast %72 : i32 to index
    %74 = memref.load %arg3[%73] : memref<80xf32, #tpu.memory_space<smem>>
    %75 = vector.broadcast %74 : f32 to vector<16x128xf32>
    %76 = arith.mulf %20, %75 : vector<16x128xf32>
    %77 = arith.addf %71, %76 : vector<16x128xf32>
    %c9_i32 = arith.constant 9 : i32
    %78 = arith.addi %25, %c9_i32 : i32
    %79 = arith.index_cast %78 : i32 to index
    %80 = memref.load %arg3[%79] : memref<80xf32, #tpu.memory_space<smem>>
    %81 = vector.broadcast %80 : f32 to vector<16x128xf32>
    %82 = arith.mulf %22, %81 : vector<16x128xf32>
    %83 = arith.addf %77, %82 : vector<16x128xf32>
    %c4_i32_23 = arith.constant 4 : i32
    %84 = arith.muli %arg1, %c4_i32_23 : i32
    %c0_i32_24 = arith.constant 0 : i32
    %85 = arith.addi %84, %c0_i32_24 : i32
    %86 = arith.index_cast %85 : i32 to index
    %87 = memref.load %arg4[%86] : memref<8xf32, #tpu.memory_space<smem>>
    %88 = vector.broadcast %87 : f32 to vector<16x128xf32>
    %89 = arith.addf %83, %88 : vector<16x128xf32>
    %cst = arith.constant 0.000000e+00 : f32
    %90 = vector.broadcast %cst : f32 to vector<16x128xf32>
    %91 = arith.maximumf %89, %90 : vector<16x128xf32>
    %c0_25 = arith.constant 0 : index
    %c0_26 = arith.constant 0 : index
    %92 = vector.load %arg10[%c0_25, %c0_26] : memref<16x512xf32, #tpu.memory_space<vmem>>, vector<16x128xf32>
    tpu.vector_store %arg10[%c0_25, %c0_26], %91 {strides = array<i32>} : memref<16x512xf32, #tpu.memory_space<vmem>>, vector<16x128xf32>,
    %c4_i32_27 = arith.constant 4 : i32
    %93 = arith.muli %arg1, %c4_i32_27 : i32
    %c1_i32_28 = arith.constant 1 : i32
    %94 = arith.addi %93, %c1_i32_28 : i32
    %c10_i32_29 = arith.constant 10 : i32
    %95 = arith.muli %94, %c10_i32_29 : i32
    %96 = arith.index_cast %95 : i32 to index
    %97 = memref.load %arg3[%96] : memref<80xf32, #tpu.memory_space<smem>>
    %98 = vector.broadcast %97 : f32 to vector<16x128xf32>
    %99 = arith.mulf %4, %98 : vector<16x128xf32>
    %c1_i32_30 = arith.constant 1 : i32
    %100 = arith.addi %95, %c1_i32_30 : i32
    %101 = arith.index_cast %100 : i32 to index
    %102 = memref.load %arg3[%101] : memref<80xf32, #tpu.memory_space<smem>>
    %103 = vector.broadcast %102 : f32 to vector<16x128xf32>
    %104 = arith.mulf %6, %103 : vector<16x128xf32>
    %105 = arith.addf %99, %104 : vector<16x128xf32>
    %c2_i32_31 = arith.constant 2 : i32
    %106 = arith.addi %95, %c2_i32_31 : i32
    %107 = arith.index_cast %106 : i32 to index
    %108 = memref.load %arg3[%107] : memref<80xf32, #tpu.memory_space<smem>>
    %109 = vector.broadcast %108 : f32 to vector<16x128xf32>
    %110 = arith.mulf %8, %109 : vector<16x128xf32>
    %111 = arith.addf %105, %110 : vector<16x128xf32>
    %c3_i32_32 = arith.constant 3 : i32
    %112 = arith.addi %95, %c3_i32_32 : i32
    %113 = arith.index_cast %112 : i32 to index
    %114 = memref.load %arg3[%113] : memref<80xf32, #tpu.memory_space<smem>>
    %115 = vector.broadcast %114 : f32 to vector<16x128xf32>
    %116 = arith.mulf %10, %115 : vector<16x128xf32>
    %117 = arith.addf %111, %116 : vector<16x128xf32>
    %c4_i32_33 = arith.constant 4 : i32
    %118 = arith.addi %95, %c4_i32_33 : i32
    %119 = arith.index_cast %118 : i32 to index
    %120 = memref.load %arg3[%119] : memref<80xf32, #tpu.memory_space<smem>>
    %121 = vector.broadcast %120 : f32 to vector<16x128xf32>
    %122 = arith.mulf %12, %121 : vector<16x128xf32>
    %123 = arith.addf %117, %122 : vector<16x128xf32>
    %c5_i32_34 = arith.constant 5 : i32
    %124 = arith.addi %95, %c5_i32_34 : i32
    %125 = arith.index_cast %124 : i32 to index
    %126 = memref.load %arg3[%125] : memref<80xf32, #tpu.memory_space<smem>>
    %127 = vector.broadcast %126 : f32 to vector<16x128xf32>
    %128 = arith.mulf %14, %127 : vector<16x128xf32>
    %129 = arith.addf %123, %128 : vector<16x128xf32>
    %c6_i32_35 = arith.constant 6 : i32
    %130 = arith.addi %95, %c6_i32_35 : i32
    %131 = arith.index_cast %130 : i32 to index
    %132 = memref.load %arg3[%131] : memref<80xf32, #tpu.memory_space<smem>>
    %133 = vector.broadcast %132 : f32 to vector<16x128xf32>
    %134 = arith.mulf %16, %133 : vector<16x128xf32>
    %135 = arith.addf %129, %134 : vector<16x128xf32>
    %c7_i32_36 = arith.constant 7 : i32
    %136 = arith.addi %95, %c7_i32_36 : i32
    %137 = arith.index_cast %136 : i32 to index
    %138 = memref.load %arg3[%137] : memref<80xf32, #tpu.memory_space<smem>>
    %139 = vector.broadcast %138 : f32 to vector<16x128xf32>
    %140 = arith.mulf %18, %139 : vector<16x128xf32>
    %141 = arith.addf %135, %140 : vector<16x128xf32>
    %c8_i32_37 = arith.constant 8 : i32
    %142 = arith.addi %95, %c8_i32_37 : i32
    %143 = arith.index_cast %142 : i32 to index
    %144 = memref.load %arg3[%143] : memref<80xf32, #tpu.memory_space<smem>>
    %145 = vector.broadcast %144 : f32 to vector<16x128xf32>
    %146 = arith.mulf %20, %145 : vector<16x128xf32>
    %147 = arith.addf %141, %146 : vector<16x128xf32>
    %c9_i32_38 = arith.constant 9 : i32
    %148 = arith.addi %95, %c9_i32_38 : i32
    %149 = arith.index_cast %148 : i32 to index
    %150 = memref.load %arg3[%149] : memref<80xf32, #tpu.memory_space<smem>>
    %151 = vector.broadcast %150 : f32 to vector<16x128xf32>
    %152 = arith.mulf %22, %151 : vector<16x128xf32>
    %153 = arith.addf %147, %152 : vector<16x128xf32>
    %c4_i32_39 = arith.constant 4 : i32
    %154 = arith.muli %arg1, %c4_i32_39 : i32
    %c1_i32_40 = arith.constant 1 : i32
    %155 = arith.addi %154, %c1_i32_40 : i32
    %156 = arith.index_cast %155 : i32 to index
    %157 = memref.load %arg4[%156] : memref<8xf32, #tpu.memory_space<smem>>
    %158 = vector.broadcast %157 : f32 to vector<16x128xf32>
    %159 = arith.addf %153, %158 : vector<16x128xf32>
    %cst_41 = arith.constant 0.000000e+00 : f32
    %160 = vector.broadcast %cst_41 : f32 to vector<16x128xf32>
    %161 = arith.maximumf %159, %160 : vector<16x128xf32>
    %c0_42 = arith.constant 0 : index
    %c128 = arith.constant 128 : index
    %162 = vector.load %arg10[%c0_42, %c128] : memref<16x512xf32, #tpu.memory_space<vmem>>, vector<16x128xf32>
    tpu.vector_store %arg10[%c0_42, %c128], %161 {strides = array<i32>} : memref<16x512xf32, #tpu.memory_space<vmem>>, vector<16x128xf32>,
    %c4_i32_43 = arith.constant 4 : i32
    %163 = arith.muli %arg1, %c4_i32_43 : i32
    %c2_i32_44 = arith.constant 2 : i32
    %164 = arith.addi %163, %c2_i32_44 : i32
    %c10_i32_45 = arith.constant 10 : i32
    %165 = arith.muli %164, %c10_i32_45 : i32
    %166 = arith.index_cast %165 : i32 to index
    %167 = memref.load %arg3[%166] : memref<80xf32, #tpu.memory_space<smem>>
    %168 = vector.broadcast %167 : f32 to vector<16x128xf32>
    %169 = arith.mulf %4, %168 : vector<16x128xf32>
    %c1_i32_46 = arith.constant 1 : i32
    %170 = arith.addi %165, %c1_i32_46 : i32
    %171 = arith.index_cast %170 : i32 to index
    %172 = memref.load %arg3[%171] : memref<80xf32, #tpu.memory_space<smem>>
    %173 = vector.broadcast %172 : f32 to vector<16x128xf32>
    %174 = arith.mulf %6, %173 : vector<16x128xf32>
    %175 = arith.addf %169, %174 : vector<16x128xf32>
    %c2_i32_47 = arith.constant 2 : i32
    %176 = arith.addi %165, %c2_i32_47 : i32
    %177 = arith.index_cast %176 : i32 to index
    %178 = memref.load %arg3[%177] : memref<80xf32, #tpu.memory_space<smem>>
    %179 = vector.broadcast %178 : f32 to vector<16x128xf32>
    %180 = arith.mulf %8, %179 : vector<16x128xf32>
    %181 = arith.addf %175, %180 : vector<16x128xf32>
    %c3_i32_48 = arith.constant 3 : i32
    %182 = arith.addi %165, %c3_i32_48 : i32
    %183 = arith.index_cast %182 : i32 to index
    %184 = memref.load %arg3[%183] : memref<80xf32, #tpu.memory_space<smem>>
    %185 = vector.broadcast %184 : f32 to vector<16x128xf32>
    %186 = arith.mulf %10, %185 : vector<16x128xf32>
    %187 = arith.addf %181, %186 : vector<16x128xf32>
    %c4_i32_49 = arith.constant 4 : i32
    %188 = arith.addi %165, %c4_i32_49 : i32
    %189 = arith.index_cast %188 : i32 to index
    %190 = memref.load %arg3[%189] : memref<80xf32, #tpu.memory_space<smem>>
    %191 = vector.broadcast %190 : f32 to vector<16x128xf32>
    %192 = arith.mulf %12, %191 : vector<16x128xf32>
    %193 = arith.addf %187, %192 : vector<16x128xf32>
    %c5_i32_50 = arith.constant 5 : i32
    %194 = arith.addi %165, %c5_i32_50 : i32
    %195 = arith.index_cast %194 : i32 to index
    %196 = memref.load %arg3[%195] : memref<80xf32, #tpu.memory_space<smem>>
    %197 = vector.broadcast %196 : f32 to vector<16x128xf32>
    %198 = arith.mulf %14, %197 : vector<16x128xf32>
    %199 = arith.addf %193, %198 : vector<16x128xf32>
    %c6_i32_51 = arith.constant 6 : i32
    %200 = arith.addi %165, %c6_i32_51 : i32
    %201 = arith.index_cast %200 : i32 to index
    %202 = memref.load %arg3[%201] : memref<80xf32, #tpu.memory_space<smem>>
    %203 = vector.broadcast %202 : f32 to vector<16x128xf32>
    %204 = arith.mulf %16, %203 : vector<16x128xf32>
    %205 = arith.addf %199, %204 : vector<16x128xf32>
    %c7_i32_52 = arith.constant 7 : i32
    %206 = arith.addi %165, %c7_i32_52 : i32
    %207 = arith.index_cast %206 : i32 to index
    %208 = memref.load %arg3[%207] : memref<80xf32, #tpu.memory_space<smem>>
    %209 = vector.broadcast %208 : f32 to vector<16x128xf32>
    %210 = arith.mulf %18, %209 : vector<16x128xf32>
    %211 = arith.addf %205, %210 : vector<16x128xf32>
    %c8_i32_53 = arith.constant 8 : i32
    %212 = arith.addi %165, %c8_i32_53 : i32
    %213 = arith.index_cast %212 : i32 to index
    %214 = memref.load %arg3[%213] : memref<80xf32, #tpu.memory_space<smem>>
    %215 = vector.broadcast %214 : f32 to vector<16x128xf32>
    %216 = arith.mulf %20, %215 : vector<16x128xf32>
    %217 = arith.addf %211, %216 : vector<16x128xf32>
    %c9_i32_54 = arith.constant 9 : i32
    %218 = arith.addi %165, %c9_i32_54 : i32
    %219 = arith.index_cast %218 : i32 to index
    %220 = memref.load %arg3[%219] : memref<80xf32, #tpu.memory_space<smem>>
    %221 = vector.broadcast %220 : f32 to vector<16x128xf32>
    %222 = arith.mulf %22, %221 : vector<16x128xf32>
    %223 = arith.addf %217, %222 : vector<16x128xf32>
    %c4_i32_55 = arith.constant 4 : i32
    %224 = arith.muli %arg1, %c4_i32_55 : i32
    %c2_i32_56 = arith.constant 2 : i32
    %225 = arith.addi %224, %c2_i32_56 : i32
    %226 = arith.index_cast %225 : i32 to index
    %227 = memref.load %arg4[%226] : memref<8xf32, #tpu.memory_space<smem>>
    %228 = vector.broadcast %227 : f32 to vector<16x128xf32>
    %229 = arith.addf %223, %228 : vector<16x128xf32>
    %cst_57 = arith.constant 0.000000e+00 : f32
    %230 = vector.broadcast %cst_57 : f32 to vector<16x128xf32>
    %231 = arith.maximumf %229, %230 : vector<16x128xf32>
    %c0_58 = arith.constant 0 : index
    %c256 = arith.constant 256 : index
    %232 = vector.load %arg10[%c0_58, %c256] : memref<16x512xf32, #tpu.memory_space<vmem>>, vector<16x128xf32>
    tpu.vector_store %arg10[%c0_58, %c256], %231 {strides = array<i32>} : memref<16x512xf32, #tpu.memory_space<vmem>>, vector<16x128xf32>,
    %c4_i32_59 = arith.constant 4 : i32
    %233 = arith.muli %arg1, %c4_i32_59 : i32
    %c3_i32_60 = arith.constant 3 : i32
    %234 = arith.addi %233, %c3_i32_60 : i32
    %c10_i32_61 = arith.constant 10 : i32
    %235 = arith.muli %234, %c10_i32_61 : i32
    %236 = arith.index_cast %235 : i32 to index
    %237 = memref.load %arg3[%236] : memref<80xf32, #tpu.memory_space<smem>>
    %238 = vector.broadcast %237 : f32 to vector<16x128xf32>
    %239 = arith.mulf %4, %238 : vector<16x128xf32>
    %c1_i32_62 = arith.constant 1 : i32
    %240 = arith.addi %235, %c1_i32_62 : i32
    %241 = arith.index_cast %240 : i32 to index
    %242 = memref.load %arg3[%241] : memref<80xf32, #tpu.memory_space<smem>>
    %243 = vector.broadcast %242 : f32 to vector<16x128xf32>
    %244 = arith.mulf %6, %243 : vector<16x128xf32>
    %245 = arith.addf %239, %244 : vector<16x128xf32>
    %c2_i32_63 = arith.constant 2 : i32
    %246 = arith.addi %235, %c2_i32_63 : i32
    %247 = arith.index_cast %246 : i32 to index
    %248 = memref.load %arg3[%247] : memref<80xf32, #tpu.memory_space<smem>>
    %249 = vector.broadcast %248 : f32 to vector<16x128xf32>
    %250 = arith.mulf %8, %249 : vector<16x128xf32>
    %251 = arith.addf %245, %250 : vector<16x128xf32>
    %c3_i32_64 = arith.constant 3 : i32
    %252 = arith.addi %235, %c3_i32_64 : i32
    %253 = arith.index_cast %252 : i32 to index
    %254 = memref.load %arg3[%253] : memref<80xf32, #tpu.memory_space<smem>>
    %255 = vector.broadcast %254 : f32 to vector<16x128xf32>
    %256 = arith.mulf %10, %255 : vector<16x128xf32>
    %257 = arith.addf %251, %256 : vector<16x128xf32>
    %c4_i32_65 = arith.constant 4 : i32
    %258 = arith.addi %235, %c4_i32_65 : i32
    %259 = arith.index_cast %258 : i32 to index
    %260 = memref.load %arg3[%259] : memref<80xf32, #tpu.memory_space<smem>>
    %261 = vector.broadcast %260 : f32 to vector<16x128xf32>
    %262 = arith.mulf %12, %261 : vector<16x128xf32>
    %263 = arith.addf %257, %262 : vector<16x128xf32>
    %c5_i32_66 = arith.constant 5 : i32
    %264 = arith.addi %235, %c5_i32_66 : i32
    %265 = arith.index_cast %264 : i32 to index
    %266 = memref.load %arg3[%265] : memref<80xf32, #tpu.memory_space<smem>>
    %267 = vector.broadcast %266 : f32 to vector<16x128xf32>
    %268 = arith.mulf %14, %267 : vector<16x128xf32>
    %269 = arith.addf %263, %268 : vector<16x128xf32>
    %c6_i32_67 = arith.constant 6 : i32
    %270 = arith.addi %235, %c6_i32_67 : i32
    %271 = arith.index_cast %270 : i32 to index
    %272 = memref.load %arg3[%271] : memref<80xf32, #tpu.memory_space<smem>>
    %273 = vector.broadcast %272 : f32 to vector<16x128xf32>
    %274 = arith.mulf %16, %273 : vector<16x128xf32>
    %275 = arith.addf %269, %274 : vector<16x128xf32>
    %c7_i32_68 = arith.constant 7 : i32
    %276 = arith.addi %235, %c7_i32_68 : i32
    %277 = arith.index_cast %276 : i32 to index
    %278 = memref.load %arg3[%277] : memref<80xf32, #tpu.memory_space<smem>>
    %279 = vector.broadcast %278 : f32 to vector<16x128xf32>
    %280 = arith.mulf %18, %279 : vector<16x128xf32>
    %281 = arith.addf %275, %280 : vector<16x128xf32>
    %c8_i32_69 = arith.constant 8 : i32
    %282 = arith.addi %235, %c8_i32_69 : i32
    %283 = arith.index_cast %282 : i32 to index
    %284 = memref.load %arg3[%283] : memref<80xf32, #tpu.memory_space<smem>>
    %285 = vector.broadcast %284 : f32 to vector<16x128xf32>
    %286 = arith.mulf %20, %285 : vector<16x128xf32>
    %287 = arith.addf %281, %286 : vector<16x128xf32>
    %c9_i32_70 = arith.constant 9 : i32
    %288 = arith.addi %235, %c9_i32_70 : i32
    %289 = arith.index_cast %288 : i32 to index
    %290 = memref.load %arg3[%289] : memref<80xf32, #tpu.memory_space<smem>>
    %291 = vector.broadcast %290 : f32 to vector<16x128xf32>
    %292 = arith.mulf %22, %291 : vector<16x128xf32>
    %293 = arith.addf %287, %292 : vector<16x128xf32>
    %c4_i32_71 = arith.constant 4 : i32
    %294 = arith.muli %arg1, %c4_i32_71 : i32
    %c3_i32_72 = arith.constant 3 : i32
    %295 = arith.addi %294, %c3_i32_72 : i32
    %296 = arith.index_cast %295 : i32 to index
    %297 = memref.load %arg4[%296] : memref<8xf32, #tpu.memory_space<smem>>
    %298 = vector.broadcast %297 : f32 to vector<16x128xf32>
    %299 = arith.addf %293, %298 : vector<16x128xf32>
    %cst_73 = arith.constant 0.000000e+00 : f32
    %300 = vector.broadcast %cst_73 : f32 to vector<16x128xf32>
    %301 = arith.maximumf %299, %300 : vector<16x128xf32>
    %c0_74 = arith.constant 0 : index
    %c384 = arith.constant 384 : index
    %302 = vector.load %arg10[%c0_74, %c384] : memref<16x512xf32, #tpu.memory_space<vmem>>, vector<16x128xf32>
    tpu.vector_store %arg10[%c0_74, %c384], %301 {strides = array<i32>} : memref<16x512xf32, #tpu.memory_space<vmem>>, vector<16x128xf32>,
    %c0_75 = arith.constant 0 : index
    %c0_76 = arith.constant 0 : index
    %303 = vector.load %arg9[%c0_75, %c0_76] : memref<16x128xf32, #tpu.memory_space<vmem>>, vector<16x128xf32>
    %c0_77 = arith.constant 0 : index
    %c0_78 = arith.constant 0 : index
    %304 = vector.load %arg10[%c0_77, %c0_78] : memref<16x512xf32, #tpu.memory_space<vmem>>, vector<16x512xf32>
    %c0_79 = arith.constant 0 : index
    %c0_80 = arith.constant 0 : index
    %305 = vector.load %arg5[%c0_79, %c0_80] : memref<512x128xf32, #tpu.memory_space<vmem>>, vector<512x128xf32>
    %cst_81 = arith.constant dense<0.000000e+00> : vector<16x128xf32>
    %306 = tpu.matmul %304, %305, %cst_81 {dimension_numbers = #tpu.dot_dimension_numbers<[1], [0], [0], [1], [0, 0, 1, 1], [], []>} : vector<16x512xf32>, vector<512x128xf32>, vector<16x128xf32> -> vector<16x128xf32>
    %307 = arith.addf %303, %306 : vector<16x128xf32>
    %c0_82 = arith.constant 0 : index
    %c0_83 = arith.constant 0 : index
    %308 = vector.load %arg9[%c0_82, %c0_83] : memref<16x128xf32, #tpu.memory_space<vmem>>, vector<16x128xf32>
    tpu.vector_store %arg9[%c0_82, %c0_83], %307 {strides = array<i32>} : memref<16x128xf32, #tpu.memory_space<vmem>>, vector<16x128xf32>,
    %c1_i32_84 = arith.constant 1 : i32
    %309 = arith.cmpi eq, %arg1, %c1_i32_84 : i32
    %310 = arith.extui %309 : i1 to i32
    %c0_i32_85 = arith.constant 0 : i32
    %311 = arith.cmpi ne, %310, %c0_i32_85 : i32
    scf.if %311 {
      %c0_86 = arith.constant 0 : index
      %c0_87 = arith.constant 0 : index
      %312 = vector.load %arg9[%c0_86, %c0_87] : memref<16x128xf32, #tpu.memory_space<vmem>>, vector<16x128xf32>
      %c0_88 = arith.constant 0 : index
      %c0_89 = arith.constant 0 : index
      %313 = vector.load %arg6[%c0_88, %c0_89] : memref<1x128xf32, #tpu.memory_space<vmem>>, vector<1x128xf32>
      %314 = vector.broadcast %313 : vector<1x128xf32> to vector<16x128xf32>
      %315 = arith.addf %312, %314 : vector<16x128xf32>
      %cst_90 = arith.constant 0.000000e+00 : f32
      %316 = vector.broadcast %cst_90 : f32 to vector<16x128xf32>
      %317 = arith.cmpf ogt, %315, %316 : vector<16x128xf32>
      %c0_91 = arith.constant 0 : index
      %c0_92 = arith.constant 0 : index
      %318 = vector.load %arg7[%c0_91, %c0_92] : memref<1x128xf32, #tpu.memory_space<vmem>>, vector<1x128xf32>
      %319 = vector.broadcast %318 : vector<1x128xf32> to vector<16x128xf32>
      %320 = arith.mulf %319, %315 : vector<16x128xf32>
      %321 = arith.select %317, %315, %320 : vector<16x128xi1>, vector<16x128xf32>
      %c0_93 = arith.constant 0 : index
      %c0_94 = arith.constant 0 : index
      %322 = vector.load %arg8[%c0_93, %c0_94] : memref<16x128xf32, #tpu.memory_space<vmem>>, vector<16x128xf32>
      tpu.vector_store %arg8[%c0_93, %c0_94], %321 {strides = array<i32>} : memref<16x128xf32, #tpu.memory_space<vmem>>, vector<16x128xf32>,
    } else {
    }
    return
  }
  func.func @transform_0(%arg0: i32, %arg1: i32) -> (i32, i32, i32) {
    %c0_i32 = arith.constant 0 : i32
    %c0_i32_0 = arith.constant 0 : i32
    %c0_i32_1 = arith.constant 0 : i32
    return %c0_i32, %arg0, %c0_i32_0 : i32, i32, i32
  }
  func.func @transform_1(%arg0: i32, %arg1: i32) -> i32 {
    %c0_i32 = arith.constant 0 : i32
    %c0_i32_0 = arith.constant 0 : i32
    return %c0_i32 : i32
  }
  func.func @transform_2(%arg0: i32, %arg1: i32) -> i32 {
    %c0_i32 = arith.constant 0 : i32
    %c0_i32_0 = arith.constant 0 : i32
    return %c0_i32 : i32
  }
  func.func @transform_3(%arg0: i32, %arg1: i32) -> (i32, i32) {
    %c0_i32 = arith.constant 0 : i32
    %c0_i32_0 = arith.constant 0 : i32
    return %arg1, %c0_i32 : i32, i32
  }
  func.func @transform_4(%arg0: i32, %arg1: i32) -> (i32, i32) {
    %c0_i32 = arith.constant 0 : i32
    %c0_i32_0 = arith.constant 0 : i32
    %c0_i32_1 = arith.constant 0 : i32
    return %c0_i32, %c0_i32_0 : i32, i32
  }
  func.func @transform_5(%arg0: i32, %arg1: i32) -> (i32, i32) {
    %c0_i32 = arith.constant 0 : i32
    %c0_i32_0 = arith.constant 0 : i32
    %c0_i32_1 = arith.constant 0 : i32
    return %c0_i32, %c0_i32_0 : i32, i32
  }
  func.func @transform_6(%arg0: i32, %arg1: i32) -> (i32, i32) {
    %c0_i32 = arith.constant 0 : i32
    %c0_i32_0 = arith.constant 0 : i32
    return %arg0, %c0_i32 : i32, i32
  }
}

</mosaic_0001>

<llo_original>
// kernel: convtranse_forward.3
$region0: #{convtranse_forward.3}
  #allocation0 [shape = 'u32[]', space=smem, size = 0x4, offset = 0x4, fixed_abs, tag = 'smem constant byte address 0x4 - core index']
  #allocation1 [shape = 'u32[144,128]{1,0:T(1,128)}', space=vmem, size = 0x12000, scoped, tag = 'internal scratch']
  %s0 = inlined_call_operand.vmem [shape: f32[16,128], index: 0, kind: input, shape index: {}]
  %s1 = inlined_call_operand.vmem [shape: f32[128,128], index: 1, kind: input, shape index: {}]
  %s2 = inlined_call_operand.vmem [shape: f32[1,128], index: 2, kind: input, shape index: {}]
  %s3 = inlined_call_operand.vmem [shape: f32[16,128], index: 3, kind: output, shape index: {}]
  %s4 = sld [smem:[#allocation0]]
  $region22: #{convtranse_forward.3} parent=0
    _
  %s6 = ssub.s32 1, %s4
  %s7 = scalar_select 0, %s6, %s4
  // Predicated region
  $region2: #{convtranse_forward.3} parent=0 // pred_check
    _
  $region3: #{convtranse_forward.3} parent=0 // pred_check_branch
    %9 = sbr.rel (0) target = $region5
  $region4: #{convtranse_forward.3} parent=0 // pred_region
    _
  $region5: #{convtranse_forward.3} parent=0 // pred_fallthru
    _
  // Predicated region
  $region6: #{convtranse_forward.3} parent=0 // pred_check
    _
  $region7: #{convtranse_forward.3} parent=0 // pred_check_branch
    %11 = sbr.rel (0) target = $region9
  $region8: #{convtranse_forward.3} parent=0 // pred_region
    _
  $region9: #{convtranse_forward.3} parent=0 // pred_fallthru
    _
  // Predicated region
  $region10: #{convtranse_forward.3} parent=0 // pred_check
    _
  $region11: #{convtranse_forward.3} parent=0 // pred_check_branch
    %13 = sbr.rel (0) target = $region13
  $region12: #{convtranse_forward.3} parent=0 // pred_region
    _
  $region13: #{convtranse_forward.3} parent=0 // pred_fallthru
    _
  %v14 = vld [vmem:[%s0] sm:$0xff]
  %v15 = vld [vmem:[%s0 + $0x8] sm:$0xff]
  %v16 = vld [vmem:[%s1] sm:$0xff]
  %v17 = vld [vmem:[%s1 + $0x8] sm:$0xff]
  %v18 = vld [vmem:[%s1 + $0x10] sm:$0xff]
  %v19 = vld [vmem:[%s1 + $0x18] sm:$0xff]
  %v20 = vld [vmem:[%s1 + $0x20] sm:$0xff]
  %v21 = vld [vmem:[%s1 + $0x28] sm:$0xff]
  %v22 = vld [vmem:[%s1 + $0x30] sm:$0xff]
  %v23 = vld [vmem:[%s1 + $0x38] sm:$0xff]
  %v24 = vld [vmem:[%s1 + $0x40] sm:$0xff]
  %v25 = vld [vmem:[%s1 + $0x48] sm:$0xff]
  %v26 = vld [vmem:[%s1 + $0x50] sm:$0xff]
  %v27 = vld [vmem:[%s1 + $0x58] sm:$0xff]
  %v28 = vld [vmem:[%s1 + $0x60] sm:$0xff]
  %v29 = vld [vmem:[%s1 + $0x68] sm:$0xff]
  %v30 = vld [vmem:[%s1 + $0x70] sm:$0xff]
  %v31 = vld [vmem:[%s1 + $0x78] sm:$0xff]
  %v32 = vld [vmem:[%s2] sm:$0x1]
  %v34 = vlaneseq
  %v35 = vshrl.u32 %v34, 7
  %v36 = vsub.s32 0, %v35
  %v37 = vrot.slane %v32, %v36
  %39 = vmatprep.subr.mxu0 0.0
  %40 = vmatpush1.xpose.msra.mxu0 %v16
  %41 = vmatprep.subr.mxu0 0.0
  %42 = vmatpush1.xpose.msra.mxu0 %v17
  %43 = vmatprep.subr.mxu0 0.0
  %44 = vmatpush1.xpose.msra.mxu0 %v18
  %45 = vmatprep.subr.mxu0 0.0
  %46 = vmatpush1.xpose.msra.mxu0 %v19
  %47 = vmatprep.subr.mxu0 0.0
  %48 = vmatpush1.xpose.msra.mxu0 %v20
  %49 = vmatprep.subr.mxu0 0.0
  %50 = vmatpush1.xpose.msra.mxu0 %v21
  %51 = vmatprep.subr.mxu0 0.0
  %52 = vmatpush1.xpose.msra.mxu0 %v22
  %53 = vmatprep.subr.mxu0 0.0
  %54 = vmatpush1.xpose.msra.mxu0 %v23
  %55 = vmatprep.subr.mxu0 0.0
  %56 = vmatpush1.xpose.msra.mxu0 %v24
  %57 = vmatprep.subr.mxu0 0.0
  %58 = vmatpush1.xpose.msra.mxu0 %v25
  %59 = vmatprep.subr.mxu0 0.0
  %60 = vmatpush1.xpose.msra.mxu0 %v26
  %61 = vmatprep.subr.mxu0 0.0
  %62 = vmatpush1.xpose.msra.mxu0 %v27
  %63 = vmatprep.subr.mxu0 0.0
  %64 = vmatpush1.xpose.msra.mxu0 %v28
  %65 = vmatprep.subr.mxu0 0.0
  %66 = vmatpush1.xpose.msra.mxu0 %v29
  %67 = vmatprep.subr.mxu0 0.0
  %68 = vmatpush1.xpose.msra.mxu0 %v30
  %69 = vmatprep.subr.mxu0 0.0
  %70 = vmatpush1.xpose.msra.mxu0 %v31
  %71 = vmatprep.subr.mxu0 0.0
  %72 = vmatpush1.xpose.msra.mxu0 0.0
  %73 = vmatprep.subr.mxu0 0.0
  %74 = vmatpush1.xpose.msra.mxu0 0.0
  %75 = vmatprep.subr.mxu0 0.0
  %76 = vmatpush1.xpose.msra.mxu0 0.0
  %77 = vmatprep.subr.mxu0 0.0
  %78 = vmatpush1.xpose.msra.mxu0 0.0
  %79 = vmatprep.subr.mxu0 0.0
  %80 = vmatpush1.xpose.msra.mxu0 0.0
  %81 = vmatprep.subr.mxu0 0.0
  %82 = vmatpush1.xpose.msra.mxu0 0.0
  %83 = vmatprep.subr.mxu0 0.0
  %84 = vmatpush1.xpose.msra.mxu0 0.0
  %85 = vmatprep.subr.mxu0 0.0
  %86 = vmatpush1.xpose.msra.mxu0 0.0
  %87 = vmatprep.subr.mxu0 0.0
  %88 = vmatpush1.xpose.msra.mxu0 0.0
  %89 = vmatprep.subr.mxu0 0.0
  %90 = vmatpush1.xpose.msra.mxu0 0.0
  %91 = vmatprep.subr.mxu0 0.0
  %92 = vmatpush1.xpose.msra.mxu0 0.0
  %93 = vmatprep.subr.mxu0 0.0
  %94 = vmatpush1.xpose.msra.mxu0 0.0
  %95 = vmatprep.subr.mxu0 0.0
  %96 = vmatpush1.xpose.msra.mxu0 0.0
  %97 = vmatprep.subr.mxu0 0.0
  %98 = vmatpush1.xpose.msra.mxu0 0.0
  %99 = vmatprep.subr.mxu0 0.0
  %100 = vmatpush1.xpose.msra.mxu0 0.0
  %101 = vmatprep.subr.mxu0 0.0
  %102 = vmatpush1.xpose.msra.mxu0 0.0
  %103 = vmatprep.mubr.f32.mxu0 0.0
  %104 = vmatmul.mubr.f32.gmra.mrb[0].mxu0 %v14
  %v105 = vpop.f32.mrb[0].mxu0
  %v106 = vadd.f32 %v37, %v105
  %v107 = vpop.f32.mrb[0].mxu0
  %108 = vmatprep.mubr.f32.mxu0 0.0
  %109 = vmatmul.mubr.f32.gmra.mrb[0].mxu0 %v15
  %v110 = vpop.f32.mrb[0].mxu0
  %v111 = vadd.f32 %v37, %v110
  %v112 = vpop.f32.mrb[0].mxu0
  %113 = vdwg.mxu0
  %114 = vst [vmem:[%s3] sm:$0xff] %v106
  %115 = vst [vmem:[%s3 + $0x8] sm:$0xff] %v111
  // Predicated region
  $region14: #{convtranse_forward.3} parent=0 // pred_check
    _
  $region15: #{convtranse_forward.3} parent=0 // pred_check_branch
    %117 = sbr.rel (0) target = $region17
  $region16: #{convtranse_forward.3} parent=0 // pred_region
    _
  $region17: #{convtranse_forward.3} parent=0 // pred_fallthru
    _
  // Predicated region
  $region18: #{convtranse_forward.3} parent=0 // pred_check
    _
  $region19: #{convtranse_forward.3} parent=0 // pred_check_branch
    %119 = sbr.rel (0) target = $region21
  $region20: #{convtranse_forward.3} parent=0 // pred_region
    _
  $region21: #{convtranse_forward.3} parent=0 // pred_fallthru
    _

// kernel: convtranse_forward.2
$region0: #{convtranse_forward.2}
  #allocation0 [shape = 'u32[]', space=smem, size = 0x4, offset = 0x4, fixed_abs, tag = 'smem constant byte address 0x4 - core index']
  #allocation1 [shape = 'u32[144,128]{1,0:T(1,128)}', space=vmem, size = 0x12000, scoped, tag = 'internal scratch']
  #allocation2 [shape = 'f32[16,128]{1,0:T(8,128)}', space=vmem, size = 0x2000, scoped, tag = 'scratch operand']
  #allocation3 [shape = 'f32[16,512]{1,0:T(8,128)}', space=vmem, size = 0x8000, scoped, tag = 'scratch operand']
  %s0 = inlined_call_operand.vmem [shape: f32[10,16,128], index: 0, kind: input, shape index: {}]
  %s1 = inlined_call_operand.vmem [shape: f32[80], index: 1, kind: input, shape index: {}]
  %s2 = inlined_call_operand.vmem [shape: f32[8], index: 2, kind: input, shape index: {}]
  %s3 = inlined_call_operand.hbm [shape: f32[1024,128], index: 3, kind: input, shape index: {}]
  %s4 = inlined_call_operand.vmem [shape: f32[1,128], index: 4, kind: input, shape index: {}]
  %s5 = inlined_call_operand.vmem [shape: f32[1,128], index: 5, kind: input, shape index: {}]
  %s6 = inlined_call_operand.vmem [shape: f32[16,128], index: 6, kind: output, shape index: {}]
  %s7 = sld [smem:[#allocation0]]
  $region77: #{convtranse_forward.2} parent=0
    _
  %s9 = ssub.s32 1, %s7
  %s10 = scalar_select 0, %s9, %s7
  $region1: #{convtranse_forward.2} parent=0
    #allocation4 [shape = 'u8[512]{0}', space=smem, size = 0x200, scoped, tag = 'input window, operand 1, single buffered']
    #allocation5 [shape = 's32[2]{0}', space=sflag, size = 0x8, scoped, tag = 'scoped memory for convtranse_forward.2']
    #allocation6 [shape = 's32[2]{0}', space=sflag, size = 0x8, scoped, tag = 'scoped memory for convtranse_forward.2']
    #allocation7 [shape = 'u8[512]{0}', space=smem, size = 0x200, scoped, tag = 'input window, operand 2, single buffered']
    #allocation8 [shape = 's32[1]{0}', space=sflag, size = 0x4, scoped, tag = 'scoped memory for convtranse_forward.2']
    #allocation9 [shape = 'u8[524288]{0}', space=vmem, size = 0x80000, scoped, tag = 'input window, operand 3']
    %11 = vsyncpa [#allocation6], 0
    %12 = vsyncpa [#allocation8], 0
    %13 = vsyncpa [#allocation5], 0
    %s14 = scalar_lea.sflag [#allocation5], 1
    %15 = vsyncpa %s14, 0
    loop: start=0, step=1, limit=4
    $region2: #{convtranse_forward.2} parent=1 // loop_pre_header
      _
    $region3: #{convtranse_forward.2} parent=1 // loop_header
      %s17 = sphi 0, %s21
      %p18 = scmp.ge.s32.totalorder %s17, 4
      %s24 = sphi 0, %s36
      %s25 = sphi 0, %s32
      %s26 = sphi 0, %s24
      %s27 = sphi 0, %s25
      %s28 = sphi 0, %s26
      %s29 = sphi 0, %s27
      %s39 = sphi 0, %s41
      %s42 = sphi 0, %s39
      %s43 = sphi 0, %s42
      %s59 = sphi 0, %s43
      %s63 = sphi 0, %s63
      %s65 = sphi 0, %s63
      %s66 = sphi 0, %s65
      %s80 = sphi 0, %s66
      %s84 = sphi 0, %s84
      %s86 = sphi 0, %s84
      %s87 = sphi 0, %s86
      %s101 = sphi 0, %s87
      %s107 = sphi 0, %s109
      %s110 = sphi 0, %s107
      %s111 = sphi 0, %s110
      %s127 = sphi 0, %s111
      %s131 = sphi 0, %s131
      %s133 = sphi 0, %s131
      %s134 = sphi 0, %s133
      %s148 = sphi 0, %s134
      %s152 = sphi 0, %s152
      %s154 = sphi 0, %s152
      %s155 = sphi 0, %s154
      %s169 = sphi 0, %s155
      %s175 = sphi 0, %s177
      %s178 = sphi 0, %s175
      %s179 = sphi 0, %s178
      %s195 = sphi 0, %s179
    $region4: #{convtranse_forward.2} parent=1 // loop_header_branch
      %20 = sbr.rel (%p18) target = $region8
    $region5: #{convtranse_forward.2} parent=1 // loop_body
      %s22 = ssub.s32 %s17, 1
      %s23 = ssub.s32 %s17, 2
      %s30 = sadd.s32 1, %s25
      %p31 = scmp.ge.s32.totalorder %s30, 2
      %s32 = scalar_select %p31, 0, %s30
      %s33 = sadd.s32 1, %s24
      %s34 = scalar_select %p31, %s33, %s24
      %p35 = scmp.ge.s32.totalorder %s34, 1
      %s36 = scalar_select %p35, 0, %s34
      %s37 = ssub.s32 %s24, %s36
      %p38 = scmp.eq.s32.totalorder %s37, 0
      %s40 = sadd.s32 %s39, 1
      %s41 = scalar_select %p38, %s39, %s40
      %p44 = pneg %p38
      %p45 = scmp.eq.s32.totalorder %s17, 1
      %p46 = por %p44, %p45
      %p47 = scmp.ne.s32.totalorder %s39, %s42
      %p48 = scmp.eq.s32.totalorder %s17, 0
      %p49 = por %p47, %p48
      %p50 = scmp.ne.s32.totalorder %s39, %s42
      %p51 = scmp.eq.s32.totalorder %s22, 1
      %p52 = por %p50, %p51
      %p53 = scmp.ne.s32.totalorder %s42, %s43
      %p54 = scmp.eq.s32.totalorder %s22, 0
      %p55 = por %p53, %p54
      %p56 = scmp.ne.s32.totalorder %s42, %s43
      %p57 = scmp.eq.s32.totalorder %s23, 1
      %p58 = por %p56, %p57
      %p60 = scmp.ne.s32.totalorder %s43, %s59
      %p61 = scmp.eq.s32.totalorder %s23, 0
      %p62 = por %p60, %p61
      %s64 = sadd.s32 %s63, 1
      %p67 = scmp.eq.s32.totalorder %s17, 1
      %p68 = scmp.ne.s32.totalorder %s63, %s65
      %p69 = scmp.eq.s32.totalorder %s17, 0
      %p70 = por %p68, %p69
      %p71 = scmp.ne.s32.totalorder %s63, %s65
      %p72 = scmp.eq.s32.totalorder %s22, 1
      %p73 = por %p71, %p72
      %p74 = scmp.ne.s32.totalorder %s65, %s66
      %p75 = scmp.eq.s32.totalorder %s22, 0
      %p76 = por %p74, %p75
      %p77 = scmp.ne.s32.totalorder %s65, %s66
      %p78 = scmp.eq.s32.totalorder %s23, 1
      %p79 = por %p77, %p78
      %p81 = scmp.ne.s32.totalorder %s66, %s80
      %p82 = scmp.eq.s32.totalorder %s23, 0
      %p83 = por %p81, %p82
      %s85 = sadd.s32 %s84, 1
      %p88 = scmp.eq.s32.totalorder %s17, 1
      %p89 = scmp.ne.s32.totalorder %s84, %s86
      %p90 = scmp.eq.s32.totalorder %s17, 0
      %p91 = por %p89, %p90
      %p92 = scmp.ne.s32.totalorder %s84, %s86
      %p93 = scmp.eq.s32.totalorder %s22, 1
      %p94 = por %p92, %p93
      %p95 = scmp.ne.s32.totalorder %s86, %s87
      %p96 = scmp.eq.s32.totalorder %s22, 0
      %p97 = por %p95, %p96
      %p98 = scmp.ne.s32.totalorder %s86, %s87
      %p99 = scmp.eq.s32.totalorder %s23, 1
      %p100 = por %p98, %p99
      %p102 = scmp.ne.s32.totalorder %s87, %s101
      %p103 = scmp.eq.s32.totalorder %s23, 0
      %p104 = por %p102, %p103
      %s105 = ssub.s32 %s25, %s32
      %p106 = scmp.eq.s32.totalorder %s105, 0
      %s108 = sadd.s32 %s107, 1
      %s109 = scalar_select %p106, %s107, %s108
      %p112 = pneg %p106
      %p113 = scmp.eq.s32.totalorder %s17, 1
      %p114 = por %p112, %p113
      %p115 = scmp.ne.s32.totalorder %s107, %s110
      %p116 = scmp.eq.s32.totalorder %s17, 0
      %p117 = por %p115, %p116
      %p118 = scmp.ne.s32.totalorder %s107, %s110
      %p119 = scmp.eq.s32.totalorder %s22, 1
      %p120 = por %p118, %p119
      %p121 = scmp.ne.s32.totalorder %s110, %s111
      %p122 = scmp.eq.s32.totalorder %s22, 0
      %p123 = por %p121, %p122
      %p124 = scmp.ne.s32.totalorder %s110, %s111
      %p125 = scmp.eq.s32.totalorder %s23, 1
      %p126 = por %p124, %p125
      %p128 = scmp.ne.s32.totalorder %s111, %s127
      %p129 = scmp.eq.s32.totalorder %s23, 0
      %p130 = por %p128, %p129
      %s132 = sadd.s32 %s131, 1
      %p135 = scmp.eq.s32.totalorder %s17, 1
      %p136 = scmp.ne.s32.totalorder %s131, %s133
      %p137 = scmp.eq.s32.totalorder %s17, 0
      %p138 = por %p136, %p137
      %p139 = scmp.ne.s32.totalorder %s131, %s133
      %p140 = scmp.eq.s32.totalorder %s22, 1
      %p141 = por %p139, %p140
      %p142 = scmp.ne.s32.totalorder %s133, %s134
      %p143 = scmp.eq.s32.totalorder %s22, 0
      %p144 = por %p142, %p143
      %p145 = scmp.ne.s32.totalorder %s133, %s134
      %p146 = scmp.eq.s32.totalorder %s23, 1
      %p147 = por %p145, %p146
      %p149 = scmp.ne.s32.totalorder %s134, %s148
      %p150 = scmp.eq.s32.totalorder %s23, 0
      %p151 = por %p149, %p150
      %s153 = sadd.s32 %s152, 1
      %p156 = scmp.eq.s32.totalorder %s17, 1
      %p157 = scmp.ne.s32.totalorder %s152, %s154
      %p158 = scmp.eq.s32.totalorder %s17, 0
      %p159 = por %p157, %p158
      %p160 = scmp.ne.s32.totalorder %s152, %s154
      %p161 = scmp.eq.s32.totalorder %s22, 1
      %p162 = por %p160, %p161
      %p163 = scmp.ne.s32.totalorder %s154, %s155
      %p164 = scmp.eq.s32.totalorder %s22, 0
      %p165 = por %p163, %p164
      %p166 = scmp.ne.s32.totalorder %s154, %s155
      %p167 = scmp.eq.s32.totalorder %s23, 1
      %p168 = por %p166, %p167
      %p170 = scmp.ne.s32.totalorder %s155, %s169
      %p171 = scmp.eq.s32.totalorder %s23, 0
      %p172 = por %p170, %p171
      %s173 = ssub.s32 %s24, %s36
      %p174 = scmp.eq.s32.totalorder %s173, 0
      %s176 = sadd.s32 %s175, 1
      %s177 = scalar_select %p174, %s175, %s176
      %p180 = pneg %p174
      %p181 = scmp.eq.s32.totalorder %s17, 1
      %p182 = por %p180, %p181
      %p183 = scmp.ne.s32.totalorder %s175, %s178
      %p184 = scmp.eq.s32.totalorder %s17, 0
      %p185 = por %p183, %p184
      %p186 = scmp.ne.s32.totalorder %s175, %s178
      %p187 = scmp.eq.s32.totalorder %s22, 1
      %p188 = por %p186, %p187
      %p189 = scmp.ne.s32.totalorder %s178, %s179
      %p190 = scmp.eq.s32.totalorder %s22, 0
      %p191 = por %p189, %p190
      %p192 = scmp.ne.s32.totalorder %s178, %s179
      %p193 = scmp.eq.s32.totalorder %s23, 1
      %p194 = por %p192, %p193
      %p196 = scmp.ne.s32.totalorder %s179, %s195
      %p197 = scmp.eq.s32.totalorder %s23, 0
      %p198 = por %p196, %p197
      %p199 = scmp.le.s32.totalorder 1, %s17
      %p200 = scmp.lt.s32.totalorder %s17, 3
      %p201 = pnand %p199, %p200
      %p202 = pneg %p201
      // Predicated region
      $region9: #{convtranse_forward.2} parent=5 // pred_check
        _
      $region10: #{convtranse_forward.2} parent=5 // pred_check_branch
        %204 = sbr.rel (%p201) target = $region12
      $region11: #{convtranse_forward.2} parent=5 // pred_region
        %s205 = ssub.s32 %s17, 1
        // Predicated region
        $region13: #{convtranse_forward.2} parent=11 // pred_check
          %p206 = pneg %p55
        $region14: #{convtranse_forward.2} parent=11 // pred_check_branch
          %208 = sbr.rel (%p206) target = $region16
        $region15: #{convtranse_forward.2} parent=11 // pred_region
          %s209 = smul.u32 2, %s26
          %p210 = scmp.lt.s32.totalorder %s209, 1
          %s211 = scalar_select %p210, %s209, 1
          %s212 = smul.addr %s211, 8
          %s213 = scalar_lea.vmem %s0, %s212
          %s214 = smul.u32 2, %s26
        $region16: #{convtranse_forward.2} parent=11 // pred_fallthru
          _
        // Predicated region
        $region17: #{convtranse_forward.2} parent=11 // pred_check
          %p215 = pneg %p76
        $region18: #{convtranse_forward.2} parent=11 // pred_check_branch
          %217 = sbr.rel (%p215) target = $region20
        $region19: #{convtranse_forward.2} parent=11 // pred_region
          %s219 = ssub.s32 16, 16
          %220 = vsyncadd [#allocation6], %s219
          %s222 = sshll.u32 %s1, 4
          %s223 = int_to_ptr.vmem [resolvable:$true] %s222
          %225 = dma.vmem_to_smem %s223, 16, [#allocation4], [#allocation6]
        $region20: #{convtranse_forward.2} parent=11 // pred_fallthru
          _
        // Predicated region
        $region21: #{convtranse_forward.2} parent=11 // pred_check
          %p226 = pneg %p97
        $region22: #{convtranse_forward.2} parent=11 // pred_check_branch
          %228 = sbr.rel (%p226) target = $region24
        $region23: #{convtranse_forward.2} parent=11 // pred_region
          %s230 = ssub.s32 16, 16
          %231 = vsyncadd [#allocation8], %s230
          %s233 = sshll.u32 %s2, 4
          %s234 = int_to_ptr.vmem [resolvable:$true] %s233
          %236 = dma.vmem_to_smem %s234, 16, [#allocation7], [#allocation8]
        $region24: #{convtranse_forward.2} parent=11 // pred_fallthru
          _
        // Predicated region
        $region25: #{convtranse_forward.2} parent=11 // pred_check
          %p237 = pneg %p144
        $region26: #{convtranse_forward.2} parent=11 // pred_check_branch
          %239 = sbr.rel (%p237) target = $region28
        $region27: #{convtranse_forward.2} parent=11 // pred_region
          _
        $region28: #{convtranse_forward.2} parent=11 // pred_fallthru
          _
        // Predicated region
        $region29: #{convtranse_forward.2} parent=11 // pred_check
          %p240 = pneg %p165
        $region30: #{convtranse_forward.2} parent=11 // pred_check_branch
          %242 = sbr.rel (%p240) target = $region32
        $region31: #{convtranse_forward.2} parent=11 // pred_region
          _
        $region32: #{convtranse_forward.2} parent=11 // pred_fallthru
          _
      $region12: #{convtranse_forward.2} parent=5 // pred_fallthru
        _
      %p243 = scmp.lt.s32.totalorder %s17, 2
      // Predicated region
      $region33: #{convtranse_forward.2} parent=5 // pred_check
        %p244 = pneg %p243
      $region34: #{convtranse_forward.2} parent=5 // pred_check_branch
        %246 = sbr.rel (%p244) target = $region36
      $region35: #{convtranse_forward.2} parent=5 // pred_region
        // Predicated region
        $region37: #{convtranse_forward.2} parent=35 // pred_check
          %p247 = pneg %p117
        $region38: #{convtranse_forward.2} parent=35 // pred_check_branch
          %249 = sbr.rel (%p247) target = $region40
        $region39: #{convtranse_forward.2} parent=35 // pred_region
          %s250 = sand.u32 %s107, 1
          %s251 = scalar_lea.sflag [#allocation5], %s250
          %s252 = sand.u32 %s107, 1
          %s253 = smul.addr %s252, 512
          %s254 = scalar_lea.vmem [#allocation9], %s253
          %s255 = smul.u32 64, %s25
          %s257 = ssub.s32 8192, 8192
          %258 = vsyncadd %s251, %s257
          %s259 = smul.addr %s255, 128
          %s260 = scalar_lea.hbm %s3, %s259
          %s261 = sshll.u32 %s254, 4
          %s262 = int_to_ptr.vmem [resolvable:$true] %s261
          %267 = dma.hbm_to_vmem [thread:$0]  %s260, 8192, %s262, %s251, 128, 128, 8
        $region40: #{convtranse_forward.2} parent=35 // pred_fallthru
          _
      $region36: #{convtranse_forward.2} parent=5 // pred_fallthru
        _
      %p268 = scmp.le.s32.totalorder 1, %s17
      %p269 = scmp.lt.s32.totalorder %s17, 3
      %p270 = pnand %p268, %p269
      %p271 = pneg %p270
      // Predicated region
      $region41: #{convtranse_forward.2} parent=5 // pred_check
        _
      $region42: #{convtranse_forward.2} parent=5 // pred_check_branch
        %273 = sbr.rel (%p270) target = $region44
      $region43: #{convtranse_forward.2} parent=5 // pred_region
        %s274 = ssub.s32 %s17, 1
        // Predicated region
        $region45: #{convtranse_forward.2} parent=43 // pred_check
          %p275 = pneg %p76
        $region46: #{convtranse_forward.2} parent=43 // pred_check_branch
          %277 = sbr.rel (%p275) target = $region48
        $region47: #{convtranse_forward.2} parent=43 // pred_region
          %278 = dma.done [#allocation6], 16
        $region48: #{convtranse_forward.2} parent=43 // pred_fallthru
          _
        // Predicated region
        $region49: #{convtranse_forward.2} parent=43 // pred_check
          %p279 = pneg %p97
        $region50: #{convtranse_forward.2} parent=43 // pred_check_branch
          %281 = sbr.rel (%p279) target = $region52
        $region51: #{convtranse_forward.2} parent=43 // pred_region
          %282 = dma.done [#allocation8], 16
        $region52: #{convtranse_forward.2} parent=43 // pred_fallthru
          _
        %s283 = sand.u32 %s110, 1
        %s284 = scalar_lea.sflag [#allocation5], %s283
        %s285 = sand.u32 %s110, 1
        %s286 = smul.addr %s285, 512
        %s287 = scalar_lea.vmem [#allocation9], %s286
        // Predicated region
        $region53: #{convtranse_forward.2} parent=43 // pred_check
          %p288 = pneg %p123
        $region54: #{convtranse_forward.2} parent=43 // pred_check_branch
          %290 = sbr.rel (%p288) target = $region56
        $region55: #{convtranse_forward.2} parent=43 // pred_region
          %291 = dma.done %s284, 8192
        $region56: #{convtranse_forward.2} parent=43 // pred_fallthru
          _
        %292 = sfence
        %s293 = smul.u32 2, %s26
        %p294 = scmp.lt.s32.totalorder %s293, 1
        %s295 = scalar_select %p294, %s293, 1
        %s296 = smul.addr %s295, 8
        %s297 = scalar_lea.vmem %s0, %s296
        %p298 = pneg %p55
        %p299 = pneg %p52
        %p300 = pneg %p76
        %p301 = pneg %p73
        %p302 = pneg %p97
        %p303 = pneg %p94
        %s304 = sand.u32 %s110, 1
        %s305 = scalar_lea.sflag [#allocation5], %s304
        %s306 = sand.u32 %s110, 1
        %s307 = smul.addr %s306, 512
        %s308 = scalar_lea.vmem [#allocation9], %s307
        %p309 = pneg %p123
        %p310 = pneg %p120
        %p311 = pneg %p144
        %p312 = pneg %p141
        %p313 = pneg %p165
        %p314 = pneg %p162
        %p315 = pneg %p191
        %p316 = pneg %p188
        %s317 = smul.u32 2, %s26
        %p318 = scmp.lt.s32.totalorder %s317, 1
        %s319 = scalar_select %p318, %s317, 1
        %s320 = smul.addr %s319, 8
        %s321 = scalar_lea.vmem %s6, %s320
        %s322 = smul.u32 2, %s26
        %p323 = scmp.lt.s32.totalorder %s322, 1
        %s324 = scalar_select %p323, %s322, 1
        %s325 = smul.addr %s324, 8
        %s326 = scalar_lea.vmem %s0, %s325
        %s327 = smul.u32 2, %s26
        %s328 = smul.u32 64, %s27
        %s329 = smul.u32 2, %s26
        %p330 = scmp.lt.s32.totalorder %s329, 1
        %s331 = scalar_select %p330, %s329, 1
        %s332 = smul.addr %s331, 8
        %s333 = scalar_lea.vmem %s6, %s332
        %s334 = smul.u32 2, %s26
        %p335 = scmp.eq.s32.totalorder %s27, 0
        // Predicated region
        $region57: #{convtranse_forward.2} parent=43 // pred_check
          %p336 = pneg %p335
        $region58: #{convtranse_forward.2} parent=43 // pred_check_branch
          %338 = sbr.rel (%p336) target = $region60
        $region59: #{convtranse_forward.2} parent=43 // pred_region
          %339 = vst [vmem:[#allocation2] sm:$0xff] 0.0
          %340 = vst [vmem:[#allocation2 + $0x8] sm:$0xff] 0.0
        $region60: #{convtranse_forward.2} parent=43 // pred_fallthru
          _
        %v341 = vld [vmem:[%s326] sm:$0xff]
        %v342 = vld [vmem:[%s326 + $0x8] sm:$0xff]
        %s343 = scalar_lea.vmem %s326, 16
        %v344 = vld [vmem:[%s343] sm:$0xff]
        %v345 = vld [vmem:[%s343 + $0x8] sm:$0xff]
        %s346 = scalar_lea.vmem %s326, 32
        %v347 = vld [vmem:[%s346] sm:$0xff]
        %v348 = vld [vmem:[%s346 + $0x8] sm:$0xff]
        %s349 = scalar_lea.vmem %s326, 48
        %v350 = vld [vmem:[%s349] sm:$0xff]
        %v351 = vld [vmem:[%s349 + $0x8] sm:$0xff]
        %s352 = scalar_lea.vmem %s326, 64
        %v353 = vld [vmem:[%s352] sm:$0xff]
        %v354 = vld [vmem:[%s352 + $0x8] sm:$0xff]
        %s355 = scalar_lea.vmem %s326, 80
        %v356 = vld [vmem:[%s355] sm:$0xff]
        %v357 = vld [vmem:[%s355 + $0x8] sm:$0xff]
        %s358 = scalar_lea.vmem %s326, 96
        %v359 = vld [vmem:[%s358] sm:$0xff]
        %v360 = vld [vmem:[%s358 + $0x8] sm:$0xff]
        %s361 = scalar_lea.vmem %s326, 112
        %v362 = vld [vmem:[%s361] sm:$0xff]
        %v363 = vld [vmem:[%s361 + $0x8] sm:$0xff]
        %s364 = scalar_lea.vmem %s326, 128
        %v365 = vld [vmem:[%s364] sm:$0xff]
        %v366 = vld [vmem:[%s364 + $0x8] sm:$0xff]
        %s367 = scalar_lea.vmem %s326, 144
        %v368 = vld [vmem:[%s367] sm:$0xff]
        %v369 = vld [vmem:[%s367 + $0x8] sm:$0xff]
        %s370 = smul.u32 %s27, 40
        %s371 = sld [smem:[#allocation4 + %s370]]
        %v372 = vstv %s371
        %v373 = vmul.f32 %v341, %v372
        %v374 = vmul.f32 %v342, %v372
        %s375 = sadd.s32 %s370, 1
        %s376 = sld [smem:[#allocation4 + %s375]]
        %v377 = vstv %s376
        %v378 = vmul.f32 %v344, %v377
        %v379 = vmul.f32 %v345, %v377
        %v380 = vadd.f32 %v373, %v378
        %v381 = vadd.f32 %v374, %v379
        %s382 = sadd.s32 %s370, 2
        %s383 = sld [smem:[#allocation4 + %s382]]
        %v384 = vstv %s383
        %v385 = vmul.f32 %v347, %v384
        %v386 = vmul.f32 %v348, %v384
        %v387 = vadd.f32 %v380, %v385
        %v388 = vadd.f32 %v381, %v386
        %s389 = sadd.s32 %s370, 3
        %s390 = sld [smem:[#allocation4 + %s389]]
        %v391 = vstv %s390
        %v392 = vmul.f32 %v350, %v391
        %v393 = vmul.f32 %v351, %v391
        %v394 = vadd.f32 %v387, %v392
        %v395 = vadd.f32 %v388, %v393
        %s396 = sadd.s32 %s370, 4
        %s397 = sld [smem:[#allocation4 + %s396]]
        %v398 = vstv %s397
        %v399 = vmul.f32 %v353, %v398
        %v400 = vmul.f32 %v354, %v398
        %v401 = vadd.f32 %v394, %v399
        %v402 = vadd.f32 %v395, %v400
        %s403 = sadd.s32 %s370, 5
        %s404 = sld [smem:[#allocation4 + %s403]]
        %v405 = vstv %s404
        %v406 = vmul.f32 %v356, %v405
        %v407 = vmul.f32 %v357, %v405
        %v408 = vadd.f32 %v401, %v406
        %v409 = vadd.f32 %v402, %v407
        %s410 = sadd.s32 %s370, 6
        %s411 = sld [smem:[#allocation4 + %s410]]
        %v412 = vstv %s411
        %v413 = vmul.f32 %v359, %v412
        %v414 = vmul.f32 %v360, %v412
        %v415 = vadd.f32 %v408, %v413
        %v416 = vadd.f32 %v409, %v414
        %s417 = sadd.s32 %s370, 7
        %s418 = sld [smem:[#allocation4 + %s417]]
        %v419 = vstv %s418
        %v420 = vmul.f32 %v362, %v419
        %v421 = vmul.f32 %v363, %v419
        %v422 = vadd.f32 %v415, %v420
        %v423 = vadd.f32 %v416, %v421
        %s424 = sadd.s32 %s370, 8
        %s425 = sld [smem:[#allocation4 + %s424]]
        %v426 = vstv %s425
        %v427 = vmul.f32 %v365, %v426
        %v428 = vmul.f32 %v366, %v426
        %v429 = vadd.f32 %v422, %v427
        %v430 = vadd.f32 %v423, %v428
        %s431 = sadd.s32 %s370, 9
        %s432 = sld [smem:[#allocation4 + %s431]]
        %v433 = vstv %s432
        %v434 = vmul.f32 %v368, %v433
        %v435 = vmul.f32 %v369, %v433
        %v436 = vadd.f32 %v429, %v434
        %v437 = vadd.f32 %v430, %v435
        %s438 = smul.u32 %s27, 4
        %s439 = sld [smem:[#allocation7 + %s438]]
        %v440 = vstv %s439
        %v441 = vadd.f32 %v436, %v440
        %v442 = vadd.f32 %v437, %v440
        %v443 = vmax.f32 %v441, 0.0
        %v444 = vmax.f32 %v442, 0.0
        %445 = vst [vmem:[#allocation3] sm:$0xff] %v443
        %446 = vst [vmem:[#allocation3 + $0x20] sm:$0xff] %v444
        %s447 = sadd.s32 %s438, 1
        %s448 = smul.u32 %s447, 10
        %s449 = sld [smem:[#allocation4 + %s448]]
        %v450 = vstv %s449
        %v451 = vmul.f32 %v341, %v450
        %v452 = vmul.f32 %v342, %v450
        %s453 = sadd.s32 %s448, 1
        %s454 = sld [smem:[#allocation4 + %s453]]
        %v455 = vstv %s454
        %v456 = vmul.f32 %v344, %v455
        %v457 = vmul.f32 %v345, %v455
        %v458 = vadd.f32 %v451, %v456
        %v459 = vadd.f32 %v452, %v457
        %s460 = sadd.s32 %s448, 2
        %s461 = sld [smem:[#allocation4 + %s460]]
        %v462 = vstv %s461
        %v463 = vmul.f32 %v347, %v462
        %v464 = vmul.f32 %v348, %v462
        %v465 = vadd.f32 %v458, %v463
        %v466 = vadd.f32 %v459, %v464
        %s467 = sadd.s32 %s448, 3
        %s468 = sld [smem:[#allocation4 + %s467]]
        %v469 = vstv %s468
        %v470 = vmul.f32 %v350, %v469
        %v471 = vmul.f32 %v351, %v469
        %v472 = vadd.f32 %v465, %v470
        %v473 = vadd.f32 %v466, %v471
        %s474 = sadd.s32 %s448, 4
        %s475 = sld [smem:[#allocation4 + %s474]]
        %v476 = vstv %s475
        %v477 = vmul.f32 %v353, %v476
        %v478 = vmul.f32 %v354, %v476
        %v479 = vadd.f32 %v472, %v477
        %v480 = vadd.f32 %v473, %v478
        %s481 = sadd.s32 %s448, 5
        %s482 = sld [smem:[#allocation4 + %s481]]
        %v483 = vstv %s482
        %v484 = vmul.f32 %v356, %v483
        %v485 = vmul.f32 %v357, %v483
        %v486 = vadd.f32 %v479, %v484
        %v487 = vadd.f32 %v480, %v485
        %s488 = sadd.s32 %s448, 6
        %s489 = sld [smem:[#allocation4 + %s488]]
        %v490 = vstv %s489
        %v491 = vmul.f32 %v359, %v490
        %v492 = vmul.f32 %v360, %v490
        %v493 = vadd.f32 %v486, %v491
        %v494 = vadd.f32 %v487, %v492
        %s495 = sadd.s32 %s448, 7
        %s496 = sld [smem:[#allocation4 + %s495]]
        %v497 = vstv %s496
        %v498 = vmul.f32 %v362, %v497
        %v499 = vmul.f32 %v363, %v497
        %v500 = vadd.f32 %v493, %v498
        %v501 = vadd.f32 %v494, %v499
        %s502 = sadd.s32 %s448, 8
        %s503 = sld [smem:[#allocation4 + %s502]]
        %v504 = vstv %s503
        %v505 = vmul.f32 %v365, %v504
        %v506 = vmul.f32 %v366, %v504
        %v507 = vadd.f32 %v500, %v505
        %v508 = vadd.f32 %v501, %v506
        %s509 = sadd.s32 %s448, 9
        %s510 = sld [smem:[#allocation4 + %s509]]
        %v511 = vstv %s510
        %v512 = vmul.f32 %v368, %v511
        %v513 = vmul.f32 %v369, %v511
        %v514 = vadd.f32 %v507, %v512
        %v515 = vadd.f32 %v508, %v513
        %s516 = sld [smem:[#allocation7 + %s447]]
        %v517 = vstv %s516
        %v518 = vadd.f32 %v514, %v517
        %v519 = vadd.f32 %v515, %v517
        %v520 = vmax.f32 %v518, 0.0
        %v521 = vmax.f32 %v519, 0.0
        %522 = vst [vmem:[#allocation3 + $0x8] sm:$0xff] %v520
        %523 = vst [vmem:[#allocation3 + $0x28] sm:$0xff] %v521
        %s524 = sadd.s32 %s438, 2
        %s525 = smul.u32 %s524, 10
        %s526 = sld [smem:[#allocation4 + %s525]]
        %v527 = vstv %s526
        %v528 = vmul.f32 %v341, %v527
        %v529 = vmul.f32 %v342, %v527
        %s530 = sadd.s32 %s525, 1
        %s531 = sld [smem:[#allocation4 + %s530]]
        %v532 = vstv %s531
        %v533 = vmul.f32 %v344, %v532
        %v534 = vmul.f32 %v345, %v532
        %v535 = vadd.f32 %v528, %v533
        %v536 = vadd.f32 %v529, %v534
        %s537 = sadd.s32 %s525, 2
        %s538 = sld [smem:[#allocation4 + %s537]]
        %v539 = vstv %s538
        %v540 = vmul.f32 %v347, %v539
        %v541 = vmul.f32 %v348, %v539
        %v542 = vadd.f32 %v535, %v540
        %v543 = vadd.f32 %v536, %v541
        %s544 = sadd.s32 %s525, 3
        %s545 = sld [smem:[#allocation4 + %s544]]
        %v546 = vstv %s545
        %v547 = vmul.f32 %v350, %v546
        %v548 = vmul.f32 %v351, %v546
        %v549 = vadd.f32 %v542, %v547
        %v550 = vadd.f32 %v543, %v548
        %s551 = sadd.s32 %s525, 4
        %s552 = sld [smem:[#allocation4 + %s551]]
        %v553 = vstv %s552
        %v554 = vmul.f32 %v353, %v553
        %v555 = vmul.f32 %v354, %v553
        %v556 = vadd.f32 %v549, %v554
        %v557 = vadd.f32 %v550, %v555
        %s558 = sadd.s32 %s525, 5
        %s559 = sld [smem:[#allocation4 + %s558]]
        %v560 = vstv %s559
        %v561 = vmul.f32 %v356, %v560
        %v562 = vmul.f32 %v357, %v560
        %v563 = vadd.f32 %v556, %v561
        %v564 = vadd.f32 %v557, %v562
        %s565 = sadd.s32 %s525, 6
        %s566 = sld [smem:[#allocation4 + %s565]]
        %v567 = vstv %s566
        %v568 = vmul.f32 %v359, %v567
        %v569 = vmul.f32 %v360, %v567
        %v570 = vadd.f32 %v563, %v568
        %v571 = vadd.f32 %v564, %v569
        %s572 = sadd.s32 %s525, 7
        %s573 = sld [smem:[#allocation4 + %s572]]
        %v574 = vstv %s573
        %v575 = vmul.f32 %v362, %v574
        %v576 = vmul.f32 %v363, %v574
        %v577 = vadd.f32 %v570, %v575
        %v578 = vadd.f32 %v571, %v576
        %s579 = sadd.s32 %s525, 8
        %s580 = sld [smem:[#allocation4 + %s579]]
        %v581 = vstv %s580
        %v582 = vmul.f32 %v365, %v581
        %v583 = vmul.f32 %v366, %v581
        %v584 = vadd.f32 %v577, %v582
        %v585 = vadd.f32 %v578, %v583
        %s586 = sadd.s32 %s525, 9
        %s587 = sld [smem:[#allocation4 + %s586]]
        %v588 = vstv %s587
        %v589 = vmul.f32 %v368, %v588
        %v590 = vmul.f32 %v369, %v588
        %v591 = vadd.f32 %v584, %v589
        %v592 = vadd.f32 %v585, %v590
        %s593 = sld [smem:[#allocation7 + %s524]]
        %v594 = vstv %s593
        %v595 = vadd.f32 %v591, %v594
        %v596 = vadd.f32 %v592, %v594
        %v597 = vmax.f32 %v595, 0.0
        %v598 = vmax.f32 %v596, 0.0
        %599 = vst [vmem:[#allocation3 + $0x10] sm:$0xff] %v597
        %600 = vst [vmem:[#allocation3 + $0x30] sm:$0xff] %v598
        %s601 = sadd.s32 %s438, 3
        %s602 = smul.u32 %s601, 10
        %s603 = sld [smem:[#allocation4 + %s602]]
        %v604 = vstv %s603
        %v605 = vmul.f32 %v341, %v604
        %v606 = vmul.f32 %v342, %v604
        %s607 = sadd.s32 %s602, 1
        %s608 = sld [smem:[#allocation4 + %s607]]
        %v609 = vstv %s608
        %v610 = vmul.f32 %v344, %v609
        %v611 = vmul.f32 %v345, %v609
        %v612 = vadd.f32 %v605, %v610
        %v613 = vadd.f32 %v606, %v611
        %s614 = sadd.s32 %s602, 2
        %s615 = sld [smem:[#allocation4 + %s614]]
        %v616 = vstv %s615
        %v617 = vmul.f32 %v347, %v616
        %v618 = vmul.f32 %v348, %v616
        %v619 = vadd.f32 %v612, %v617
        %v620 = vadd.f32 %v613, %v618
        %s621 = sadd.s32 %s602, 3
        %s622 = sld [smem:[#allocation4 + %s621]]
        %v623 = vstv %s622
        %v624 = vmul.f32 %v350, %v623
        %v625 = vmul.f32 %v351, %v623
        %v626 = vadd.f32 %v619, %v624
        %v627 = vadd.f32 %v620, %v625
        %s628 = sadd.s32 %s602, 4
        %s629 = sld [smem:[#allocation4 + %s628]]
        %v630 = vstv %s629
        %v631 = vmul.f32 %v353, %v630
        %v632 = vmul.f32 %v354, %v630
        %v633 = vadd.f32 %v626, %v631
        %v634 = vadd.f32 %v627, %v632
        %s635 = sadd.s32 %s602, 5
        %s636 = sld [smem:[#allocation4 + %s635]]
        %v637 = vstv %s636
        %v638 = vmul.f32 %v356, %v637
        %v639 = vmul.f32 %v357, %v637
        %v640 = vadd.f32 %v633, %v638
        %v641 = vadd.f32 %v634, %v639
        %s642 = sadd.s32 %s602, 6
        %s643 = sld [smem:[#allocation4 + %s642]]
        %v644 = vstv %s643
        %v645 = vmul.f32 %v359, %v644
        %v646 = vmul.f32 %v360, %v644
        %v647 = vadd.f32 %v640, %v645
        %v648 = vadd.f32 %v641, %v646
        %s649 = sadd.s32 %s602, 7
        %s650 = sld [smem:[#allocation4 + %s649]]
        %v651 = vstv %s650
        %v652 = vmul.f32 %v362, %v651
        %v653 = vmul.f32 %v363, %v651
        %v654 = vadd.f32 %v647, %v652
        %v655 = vadd.f32 %v648, %v653
        %s656 = sadd.s32 %s602, 8
        %s657 = sld [smem:[#allocation4 + %s656]]
        %v658 = vstv %s657
        %v659 = vmul.f32 %v365, %v658
        %v660 = vmul.f32 %v366, %v658
        %v661 = vadd.f32 %v654, %v659
        %v662 = vadd.f32 %v655, %v660
        %s663 = sadd.s32 %s602, 9
        %s664 = sld [smem:[#allocation4 + %s663]]
        %v665 = vstv %s664
        %v666 = vmul.f32 %v368, %v665
        %v667 = vmul.f32 %v369, %v665
        %v668 = vadd.f32 %v661, %v666
        %v669 = vadd.f32 %v662, %v667
        %s670 = sld [smem:[#allocation7 + %s601]]
        %v671 = vstv %s670
        %v672 = vadd.f32 %v668, %v671
        %v673 = vadd.f32 %v669, %v671
        %v674 = vmax.f32 %v672, 0.0
        %v675 = vmax.f32 %v673, 0.0
        %676 = vst [vmem:[#allocation3 + $0x18] sm:$0xff] %v674
        %677 = vst [vmem:[#allocation3 + $0x38] sm:$0xff] %v675
        %v678 = vld [vmem:[#allocation2] sm:$0xff]
        %v679 = vld [vmem:[#allocation2 + $0x8] sm:$0xff]
        %v680 = vld [vmem:[#allocation3] sm:$0xff]
        %v681 = vld [vmem:[#allocation3 + $0x8] sm:$0xff]
        %v682 = vld [vmem:[#allocation3 + $0x10] sm:$0xff]
        %v683 = vld [vmem:[#allocation3 + $0x18] sm:$0xff]
        %v684 = vld [vmem:[#allocation3 + $0x20] sm:$0xff]
        %v685 = vld [vmem:[#allocation3 + $0x28] sm:$0xff]
        %v686 = vld [vmem:[#allocation3 + $0x30] sm:$0xff]
        %v687 = vld [vmem:[#allocation3 + $0x38] sm:$0xff]
        %v688 = vld [vmem:[%s287] sm:$0xff]
        %v689 = vld [vmem:[%s287 + $0x8] sm:$0xff]
        %v690 = vld [vmem:[%s287 + $0x10] sm:$0xff]
        %v691 = vld [vmem:[%s287 + $0x18] sm:$0xff]
        %v692 = vld [vmem:[%s287 + $0x20] sm:$0xff]
        %v693 = vld [vmem:[%s287 + $0x28] sm:$0xff]
        %v694 = vld [vmem:[%s287 + $0x30] sm:$0xff]
        %v695 = vld [vmem:[%s287 + $0x38] sm:$0xff]
        %v696 = vld [vmem:[%s287 + $0x40] sm:$0xff]
        %v697 = vld [vmem:[%s287 + $0x48] sm:$0xff]
        %v698 = vld [vmem:[%s287 + $0x50] sm:$0xff]
        %v699 = vld [vmem:[%s287 + $0x58] sm:$0xff]
        %v700 = vld [vmem:[%s287 + $0x60] sm:$0xff]
        %v701 = vld [vmem:[%s287 + $0x68] sm:$0xff]
        %v702 = vld [vmem:[%s287 + $0x70] sm:$0xff]
        %v703 = vld [vmem:[%s287 + $0x78] sm:$0xff]
        %v704 = vld [vmem:[%s287 + $0x80] sm:$0xff]
        %v705 = vld [vmem:[%s287 + $0x88] sm:$0xff]
        %v706 = vld [vmem:[%s287 + $0x90] sm:$0xff]
        %v707 = vld [vmem:[%s287 + $0x98] sm:$0xff]
        %v708 = vld [vmem:[%s287 + $0xa0] sm:$0xff]
        %v709 = vld [vmem:[%s287 + $0xa8] sm:$0xff]
        %v710 = vld [vmem:[%s287 + $0xb0] sm:$0xff]
        %v711 = vld [vmem:[%s287 + $0xb8] sm:$0xff]
        %v712 = vld [vmem:[%s287 + $0xc0] sm:$0xff]
        %v713 = vld [vmem:[%s287 + $0xc8] sm:$0xff]
        %v714 = vld [vmem:[%s287 + $0xd0] sm:$0xff]
        %v715 = vld [vmem:[%s287 + $0xd8] sm:$0xff]
        %v716 = vld [vmem:[%s287 + $0xe0] sm:$0xff]
        %v717 = vld [vmem:[%s287 + $0xe8] sm:$0xff]
        %v718 = vld [vmem:[%s287 + $0xf0] sm:$0xff]
        %v719 = vld [vmem:[%s287 + $0xf8] sm:$0xff]
        %v720 = vld [vmem:[%s287 + $0x100] sm:$0xff]
        %v721 = vld [vmem:[%s287 + $0x108] sm:$0xff]
        %v722 = vld [vmem:[%s287 + $0x110] sm:$0xff]
        %v723 = vld [vmem:[%s287 + $0x118] sm:$0xff]
        %v724 = vld [vmem:[%s287 + $0x120] sm:$0xff]
        %v725 = vld [vmem:[%s287 + $0x128] sm:$0xff]
        %v726 = vld [vmem:[%s287 + $0x130] sm:$0xff]
        %v727 = vld [vmem:[%s287 + $0x138] sm:$0xff]
        %v728 = vld [vmem:[%s287 + $0x140] sm:$0xff]
        %v729 = vld [vmem:[%s287 + $0x148] sm:$0xff]
        %v730 = vld [vmem:[%s287 + $0x150] sm:$0xff]
        %v731 = vld [vmem:[%s287 + $0x158] sm:$0xff]
        %v732 = vld [vmem:[%s287 + $0x160] sm:$0xff]
        %v733 = vld [vmem:[%s287 + $0x168] sm:$0xff]
        %v734 = vld [vmem:[%s287 + $0x170] sm:$0xff]
        %v735 = vld [vmem:[%s287 + $0x178] sm:$0xff]
        %v736 = vld [vmem:[%s287 + $0x180] sm:$0xff]
        %v737 = vld [vmem:[%s287 + $0x188] sm:$0xff]
        %v738 = vld [vmem:[%s287 + $0x190] sm:$0xff]
        %v739 = vld [vmem:[%s287 + $0x198] sm:$0xff]
        %v740 = vld [vmem:[%s287 + $0x1a0] sm:$0xff]
        %v741 = vld [vmem:[%s287 + $0x1a8] sm:$0xff]
        %v742 = vld [vmem:[%s287 + $0x1b0] sm:$0xff]
        %v743 = vld [vmem:[%s287 + $0x1b8] sm:$0xff]
        %v744 = vld [vmem:[%s287 + $0x1c0] sm:$0xff]
        %v745 = vld [vmem:[%s287 + $0x1c8] sm:$0xff]
        %v746 = vld [vmem:[%s287 + $0x1d0] sm:$0xff]
        %v747 = vld [vmem:[%s287 + $0x1d8] sm:$0xff]
        %v748 = vld [vmem:[%s287 + $0x1e0] sm:$0xff]
        %v749 = vld [vmem:[%s287 + $0x1e8] sm:$0xff]
        %v750 = vld [vmem:[%s287 + $0x1f0] sm:$0xff]
        %v751 = vld [vmem:[%s287 + $0x1f8] sm:$0xff]
        %752 = vmatprep.subr.mxu0 0.0
        %753 = vmatpush1.msra.mxu0 %v688
        %754 = vmatprep.subr.mxu0 0.0
        %755 = vmatpush1.msra.mxu0 %v689
        %756 = vmatprep.subr.mxu0 0.0
        %757 = vmatpush1.msra.mxu0 %v690
        %758 = vmatprep.subr.mxu0 0.0
        %759 = vmatpush1.msra.mxu0 %v691
        %760 = vmatprep.subr.mxu0 0.0
        %761 = vmatpush1.msra.mxu0 %v692
        %762 = vmatprep.subr.mxu0 0.0
        %763 = vmatpush1.msra.mxu0 %v693
        %764 = vmatprep.subr.mxu0 0.0
        %765 = vmatpush1.msra.mxu0 %v694
        %766 = vmatprep.subr.mxu0 0.0
        %767 = vmatpush1.msra.mxu0 %v695
        %768 = vmatprep.subr.mxu0 0.0
        %769 = vmatpush1.msra.mxu0 %v696
        %770 = vmatprep.subr.mxu0 0.0
        %771 = vmatpush1.msra.mxu0 %v697
        %772 = vmatprep.subr.mxu0 0.0
        %773 = vmatpush1.msra.mxu0 %v698
        %774 = vmatprep.subr.mxu0 0.0
        %775 = vmatpush1.msra.mxu0 %v699
        %776 = vmatprep.subr.mxu0 0.0
        %777 = vmatpush1.msra.mxu0 %v700
        %778 = vmatprep.subr.mxu0 0.0
        %779 = vmatpush1.msra.mxu0 %v701
        %780 = vmatprep.subr.mxu0 0.0
        %781 = vmatpush1.msra.mxu0 %v702
        %782 = vmatprep.subr.mxu0 0.0
        %783 = vmatpush1.msra.mxu0 %v703
        %784 = vmatprep.subr.mxu0 0.0
        %785 = vmatpush1.msra.mxu0 %v704
        %786 = vmatprep.subr.mxu0 0.0
        %787 = vmatpush1.msra.mxu0 %v705
        %788 = vmatprep.subr.mxu0 0.0
        %789 = vmatpush1.msra.mxu0 %v706
        %790 = vmatprep.subr.mxu0 0.0
        %791 = vmatpush1.msra.mxu0 %v707
        %792 = vmatprep.subr.mxu0 0.0
        %793 = vmatpush1.msra.mxu0 %v708
        %794 = vmatprep.subr.mxu0 0.0
        %795 = vmatpush1.msra.mxu0 %v709
        %796 = vmatprep.subr.mxu0 0.0
        %797 = vmatpush1.msra.mxu0 %v710
        %798 = vmatprep.subr.mxu0 0.0
        %799 = vmatpush1.msra.mxu0 %v711
        %800 = vmatprep.subr.mxu0 0.0
        %801 = vmatpush1.msra.mxu0 %v712
        %802 = vmatprep.subr.mxu0 0.0
        %803 = vmatpush1.msra.mxu0 %v713
        %804 = vmatprep.subr.mxu0 0.0
        %805 = vmatpush1.msra.mxu0 %v714
        %806 = vmatprep.subr.mxu0 0.0
        %807 = vmatpush1.msra.mxu0 %v715
        %808 = vmatprep.subr.mxu0 0.0
        %809 = vmatpush1.msra.mxu0 %v716
        %810 = vmatprep.subr.mxu0 0.0
        %811 = vmatpush1.msra.mxu0 %v717
        %812 = vmatprep.subr.mxu0 0.0
        %813 = vmatpush1.msra.mxu0 %v718
        %814 = vmatprep.subr.mxu0 0.0
        %815 = vmatpush1.msra.mxu0 %v719
        %816 = vmatprep.mubr.f32.mxu0 %v681
        %817 = vmatmul.mubr.f32.gmra.mrb[0].mxu0 %v680
        %v818 = vpop.f32.mrb[0].mxu0
        %v819 = vadd.f32 0.0, %v818
        %v820 = vpop.f32.mrb[0].mxu0
        %821 = vmatprep.mubr.f32.mxu0 %v685
        %822 = vmatmul.mubr.f32.gmra.mrb[0].mxu0 %v684
        %v823 = vpop.f32.mrb[0].mxu0
        %v824 = vadd.f32 0.0, %v823
        %v825 = vpop.f32.mrb[0].mxu0
        %826 = vdwg.mxu0
        %827 = vmatprep.subr.mxu0 0.0
        %828 = vmatpush1.msra.mxu0 %v720
        %829 = vmatprep.subr.mxu0 0.0
        %830 = vmatpush1.msra.mxu0 %v721
        %831 = vmatprep.subr.mxu0 0.0
        %832 = vmatpush1.msra.mxu0 %v722
        %833 = vmatprep.subr.mxu0 0.0
        %834 = vmatpush1.msra.mxu0 %v723
        %835 = vmatprep.subr.mxu0 0.0
        %836 = vmatpush1.msra.mxu0 %v724
        %837 = vmatprep.subr.mxu0 0.0
        %838 = vmatpush1.msra.mxu0 %v725
        %839 = vmatprep.subr.mxu0 0.0
        %840 = vmatpush1.msra.mxu0 %v726
        %841 = vmatprep.subr.mxu0 0.0
        %842 = vmatpush1.msra.mxu0 %v727
        %843 = vmatprep.subr.mxu0 0.0
        %844 = vmatpush1.msra.mxu0 %v728
        %845 = vmatprep.subr.mxu0 0.0
        %846 = vmatpush1.msra.mxu0 %v729
        %847 = vmatprep.subr.mxu0 0.0
        %848 = vmatpush1.msra.mxu0 %v730
        %849 = vmatprep.subr.mxu0 0.0
        %850 = vmatpush1.msra.mxu0 %v731
        %851 = vmatprep.subr.mxu0 0.0
        %852 = vmatpush1.msra.mxu0 %v732
        %853 = vmatprep.subr.mxu0 0.0
        %854 = vmatpush1.msra.mxu0 %v733
        %855 = vmatprep.subr.mxu0 0.0
        %856 = vmatpush1.msra.mxu0 %v734
        %857 = vmatprep.subr.mxu0 0.0
        %858 = vmatpush1.msra.mxu0 %v735
        %859 = vmatprep.subr.mxu0 0.0
        %860 = vmatpush1.msra.mxu0 %v736
        %861 = vmatprep.subr.mxu0 0.0
        %862 = vmatpush1.msra.mxu0 %v737
        %863 = vmatprep.subr.mxu0 0.0
        %864 = vmatpush1.msra.mxu0 %v738
        %865 = vmatprep.subr.mxu0 0.0
        %866 = vmatpush1.msra.mxu0 %v739
        %867 = vmatprep.subr.mxu0 0.0
        %868 = vmatpush1.msra.mxu0 %v740
        %869 = vmatprep.subr.mxu0 0.0
        %870 = vmatpush1.msra.mxu0 %v741
        %871 = vmatprep.subr.mxu0 0.0
        %872 = vmatpush1.msra.mxu0 %v742
        %873 = vmatprep.subr.mxu0 0.0
        %874 = vmatpush1.msra.mxu0 %v743
        %875 = vmatprep.subr.mxu0 0.0
        %876 = vmatpush1.msra.mxu0 %v744
        %877 = vmatprep.subr.mxu0 0.0
        %878 = vmatpush1.msra.mxu0 %v745
        %879 = vmatprep.subr.mxu0 0.0
        %880 = vmatpush1.msra.mxu0 %v746
        %881 = vmatprep.subr.mxu0 0.0
        %882 = vmatpush1.msra.mxu0 %v747
        %883 = vmatprep.subr.mxu0 0.0
        %884 = vmatpush1.msra.mxu0 %v748
        %885 = vmatprep.subr.mxu0 0.0
        %886 = vmatpush1.msra.mxu0 %v749
        %887 = vmatprep.subr.mxu0 0.0
        %888 = vmatpush1.msra.mxu0 %v750
        %889 = vmatprep.subr.mxu0 0.0
        %890 = vmatpush1.msra.mxu0 %v751
        %891 = vmatprep.mubr.f32.mxu0 %v683
        %892 = vmatmul.mubr.f32.gmra.mrb[0].mxu0 %v682
        %v893 = vpop.f32.mrb[0].mxu0
        %v894 = vadd.f32 %v819, %v893
        %v895 = vpop.f32.mrb[0].mxu0
        %896 = vmatprep.mubr.f32.mxu0 %v687
        %897 = vmatmul.mubr.f32.gmra.mrb[0].mxu0 %v686
        %v898 = vpop.f32.mrb[0].mxu0
        %v899 = vadd.f32 %v824, %v898
        %v900 = vpop.f32.mrb[0].mxu0
        %901 = vdwg.mxu0
        %v902 = vadd.f32 %v678, %v894
        %v903 = vadd.f32 %v679, %v899
        %904 = vst [vmem:[#allocation2] sm:$0xff] %v902
        %905 = vst [vmem:[#allocation2 + $0x8] sm:$0xff] %v903
        %p906 = scmp.eq.s32.totalorder %s27, 1
        // Predicated region
        $region61: #{convtranse_forward.2} parent=43 // pred_check
          %p907 = pneg %p906
        $region62: #{convtranse_forward.2} parent=43 // pred_check_branch
          %909 = sbr.rel (%p907) target = $region64
        $region63: #{convtranse_forward.2} parent=43 // pred_region
          %v910 = vld [vmem:[#allocation2] sm:$0xff]
          %v911 = vld [vmem:[#allocation2 + $0x8] sm:$0xff]
          %v912 = vld [vmem:[%s4] sm:$0x1]
          %v914 = vlaneseq
          %v915 = vshrl.u32 %v914, 7
          %v916 = vsub.s32 0, %v915
          %v917 = vrot.slane %v912, %v916
          %v919 = vadd.f32 %v910, %v917
          %v920 = vadd.f32 %v911, %v917
          %vm921 = vcmp.gt.f32.partialorder %v919, 0.0
          %vm922 = vcmp.gt.f32.partialorder %v920, 0.0
          %v923 = vld [vmem:[%s5] sm:$0x1]
          %v925 = vlaneseq
          %v926 = vshrl.u32 %v925, 7
          %v927 = vsub.s32 0, %v926
          %v928 = vrot.slane %v923, %v927
          %v930 = vmul.f32 %v928, %v919
          %v931 = vmul.f32 %v928, %v920
          %v932 = vsel %vm921, %v919, %v930
          %v933 = vsel %vm922, %v920, %v931
          %934 = vst [vmem:[%s333] sm:$0xff] %v932
          %935 = vst [vmem:[%s333 + $0x8] sm:$0xff] %v933
        $region64: #{convtranse_forward.2} parent=43 // pred_fallthru
          _
        %s936 = smul.u32 2, %s26
        %p937 = scmp.lt.s32.totalorder %s936, 1
        %s938 = scalar_select %p937, %s936, 1
        %s939 = smul.addr %s938, 8
        %s940 = scalar_lea.vmem %s6, %s939
        // Predicated region
        $region65: #{convtranse_forward.2} parent=43 // pred_check
          %p941 = pneg %p188
        $region66: #{convtranse_forward.2} parent=43 // pred_check_branch
          %943 = sbr.rel (%p941) target = $region68
        $region67: #{convtranse_forward.2} parent=43 // pred_region
          %s944 = smul.u32 2, %s26
        $region68: #{convtranse_forward.2} parent=43 // pred_fallthru
          _
        // Predicated region
        $region69: #{convtranse_forward.2} parent=43 // pred_check
          %p945 = pneg %p188
        $region70: #{convtranse_forward.2} parent=43 // pred_check_branch
          %947 = sbr.rel (%p945) target = $region72
        $region71: #{convtranse_forward.2} parent=43 // pred_region
          %s948 = smul.u32 2, %s26
          %p949 = scmp.lt.s32.totalorder %s948, 1
          %s950 = scalar_select %p949, %s948, 1
          %s951 = smul.addr %s950, 8
          %s952 = scalar_lea.vmem %s6, %s951
        $region72: #{convtranse_forward.2} parent=43 // pred_fallthru
          _
      $region44: #{convtranse_forward.2} parent=5 // pred_fallthru
        _
      %p953 = scmp.le.s32.totalorder 2, %s17
      // Predicated region
      $region73: #{convtranse_forward.2} parent=5 // pred_check
        %p954 = pneg %p953
      $region74: #{convtranse_forward.2} parent=5 // pred_check_branch
        %956 = sbr.rel (%p954) target = $region76
      $region75: #{convtranse_forward.2} parent=5 // pred_region
        %s957 = ssub.s32 %s17, 2
      $region76: #{convtranse_forward.2} parent=5 // pred_fallthru
        _
    $region6: #{convtranse_forward.2} parent=1 // loop_footer
      %s21 = sadd.s32 1, %s17
    $region7: #{convtranse_forward.2} parent=1 // loop_footer_branch
      %16 = sbr.rel target = $region3
    $region8: #{convtranse_forward.2} parent=1 // loop_exit
      _
    %958 = vsyncpa [#allocation5], 1
    %s959 = scalar_lea.sflag [#allocation5], 1
    %960 = vsyncpa %s959, 1
    %961 = vsyncpa [#allocation6], 1
    %s962 = scalar_lea.sflag [#allocation6], 1
    %963 = vsyncpa %s962, 1
    %964 = vsyncpa [#allocation8], 1

</llo_original>
